<compile_context>
chip_gen: v7x
topology: tpu7x:2x2x1
jax: 0.10.0
libtpu: 0.0.40
codegen_flags: <defaults>
</compile_context>

<pallas_src>
import functools

import jax
import jax.numpy as jnp
from jax.experimental import pallas as pl
from jax.experimental.pallas import tpu as pltpu


def swiglu_kernel(x_ref, w13_ref, b13_ref, w2_ref, b2_ref, o_ref,
                  g_ref, acc_ref, *, eps, inner, chunk):
    """One token tile: fused fc1||fc3 -> SiLU gate -> RMSNorm -> fc2."""
    n_chunks = inner // chunk
    tile_n = x_ref.shape[0]
    x_bf = x_ref[...].astype(jnp.bfloat16)          # MXU operand; no-op if bf16 in

    # ---- Pass 1: fused fc1||fc3 gate per I-chunk; accumulate sum-of-squares.
    ssq = jnp.zeros((tile_n, 1), jnp.float32)
    for c in range(n_chunks):
        lo = c * chunk            # offset in the original inner dimension
        lo2 = 2 * lo              # offset in the per-chunk interleaved (D, 2I) weight
        h = jnp.dot(x_bf, w13_ref[:, lo2:lo2 + 2 * chunk],
                    preferred_element_type=jnp.float32)
        h = h + b13_ref[:, lo2:lo2 + 2 * chunk]
        h1 = h[:, :chunk]
        h3 = h[:, chunk:]
        g = (h1 * jax.nn.sigmoid(h1)) * h3           # SiLU gate in f32 (EUP sigmoid)
        g_ref[:, lo:lo + chunk] = g                  # stash for pass 2
        ssq = ssq + jnp.sum(g * g, axis=-1, keepdims=True)

    # RMSNorm scale (f32, matches PyTorch RMSNorm semantics).
    inv_rms = jax.lax.rsqrt(ssq * (1.0 / inner) + eps)     # (tile_n, 1)

    # ---- Pass 2: normalize per chunk, fc2 (norm_w pre-folded into w2 rows).
    for c in range(n_chunks):
        lo = c * chunk
        gb = (g_ref[:, lo:lo + chunk] * inv_rms).astype(jnp.bfloat16)
        part = jnp.dot(gb, w2_ref[lo:lo + chunk, :],
                       preferred_element_type=jnp.float32)
        if c == 0:
            acc_ref[...] = part
        else:
            acc_ref[...] += part

    o_ref[...] = (acc_ref[...] + b2_ref[...]).astype(o_ref.dtype)


def _tpu_vmem_capacity_bytes() -> int:
    """Physical VMEM per TensorCore (best-effort query; conservative default)."""
    try:
        return int(pltpu.get_tpu_info().vmem_capacity_bytes)
    except Exception:  # introspection only -- the conservative default is safe.
        return 64 * 1024 * 1024          # v7x-sized (smallest current generation)


def _pick_tile_n(n_tokens: int, vmem_bytes: int) -> int:
    """Generation-aware token-tile size."""
    if vmem_bytes >= 100 * 1024 * 1024:
        # v5e/v6e: 128 MiB VMEM, single TensorCore -> big tiles, few grid steps.
        tile = min(n_tokens, 1024)
    else:
        # v7x-class: 64 MiB VMEM, 2 TensorCores -> smaller tiles and >= 4 grid
        # steps so each core gets >= 2 steps (x/out DMA pipelining overlaps).
        tile = min(n_tokens, 256)
        while n_tokens // tile < 4 and tile > 64:
            tile //= 2
    while tile > 8 and n_tokens % tile != 0:
        tile //= 2
    return tile


def _pick_chunk(inner: int, max_chunk: int = 512) -> int:
    """Largest multiple of 128 dividing `inner`, capped at max_chunk."""
    best = inner
    c = 128
    while c <= min(inner, max_chunk):
        if inner % c == 0:
            best = c
        c += 128
    return best


def swiglu_pallas(x, params, *, eps, tile_n=None, chunk_i=None):
    """Fused SwiGLU forward.  x: [N, D]; linear weights stored as [in, out]."""
    n_tokens, d_model = x.shape
    inner = params["w1"].shape[1]

    vmem_cap = _tpu_vmem_capacity_bytes()
    if tile_n is None:
        tile_n = _pick_tile_n(n_tokens, vmem_cap)
    if chunk_i is None:
        chunk_i = _pick_chunk(inner)

    assert tile_n % 8 == 0, "tile_n must be a multiple of 8 (f32 sublane)"
    assert n_tokens % tile_n == 0, "pad the token count to a multiple of tile_n"
    assert inner % chunk_i == 0, "chunk_i must divide the inner dimension"
    assert chunk_i % 128 == 0 or chunk_i == inner, "chunk_i must be lane aligned"
    n_chunks = inner // chunk_i
    grid = (n_tokens // tile_n,)

    # ---- One-time parameter prep (cheap, constant-folded by XLA).
    # Interleave w1 / w3 per I-chunk so each chunk's gate stage is ONE matmul:
    #   [w1_c0 | w3_c0 | w1_c1 | w3_c1 | ...] -> (D, 2I) bf16
    w1 = params["w1"].astype(jnp.float32).reshape(d_model, n_chunks, chunk_i)
    w3 = params["w3"].astype(jnp.float32).reshape(d_model, n_chunks, chunk_i)
    w13 = jnp.concatenate([w1, w3], axis=2).reshape(d_model, 2 * inner)
    w13 = w13.astype(jnp.bfloat16)
    b1 = params["b1"].astype(jnp.float32).reshape(1, n_chunks, chunk_i)
    b3 = params["b3"].astype(jnp.float32).reshape(1, n_chunks, chunk_i)
    b13 = jnp.concatenate([b1, b3], axis=2).reshape(1, 2 * inner)
    # Fold the RMSNorm weight into fc2 rows (g is cast to bf16 right after the
    # norm anyway, so this only moves bf16 rounding around).
    norm_w = params["norm_w"].astype(jnp.float32).reshape(inner, 1)
    w2 = (norm_w * params["w2"].astype(jnp.float32)).astype(jnp.bfloat16)
    b2 = params["b2"].astype(jnp.float32).reshape(1, d_model)

    kernel = functools.partial(swiglu_kernel, eps=eps, inner=inner, chunk=chunk_i)

    cost = pl.CostEstimate(
        flops=6 * n_tokens * d_model * inner + 8 * n_tokens * inner,
        transcendentals=n_tokens * inner + n_tokens,          # sigmoid + rsqrt
        bytes_accessed=(2 * n_tokens * d_model * x.dtype.itemsize   # x in + y out
                        + (d_model * 2 * inner + inner * d_model) * 2  # bf16 weights
                        + (2 * inner + d_model) * 4),                  # f32 biases
    )

    # Leave headroom below physical VMEM for Mosaic scratch / semaphores:
    # ~48 MiB on v7x (64 MiB physical), ~96 MiB on v5e/v6e (128 MiB physical).
    vmem_limit = min(int(vmem_cap * 3 // 4), 96 * 1024 * 1024)

    compiler_params = pltpu.CompilerParams(
        dimension_semantics=("parallel",),     # token tiles shard across TCs (v7x)
        vmem_limit_bytes=vmem_limit,
    )

    def const(shape):
        # Grid-invariant operand: constant block index -> fetched once, reused.
        return pl.BlockSpec(shape, lambda i: (0,) * len(shape))

    grid_spec = pltpu.PrefetchScalarGridSpec(
        num_scalar_prefetch=0,
        grid=grid,
        in_specs=[
            pl.BlockSpec((tile_n, d_model), lambda i: (i, 0)),  # x tile
            const((d_model, 2 * inner)),                        # w1||w3 interleaved
            const((1, 2 * inner)),                              # b1||b3 interleaved
            const((inner, d_model)),                            # norm_w-folded w2
            const((1, d_model)),                                # b2
        ],
        out_specs=pl.BlockSpec((tile_n, d_model), lambda i: (i, 0)),
        scratch_shapes=[
            pltpu.VMEM((tile_n, inner), jnp.float32),    # gate values between passes
            pltpu.VMEM((tile_n, d_model), jnp.float32),  # fc2 f32 accumulator
        ],
    )

    return pl.pallas_call(
        kernel,
        out_shape=jax.ShapeDtypeStruct((n_tokens, d_model), x.dtype),
        grid_spec=grid_spec,
        compiler_params=compiler_params,
        cost_estimate=cost,
    )(x, w13, b13, w2, b2)


def swiglu_reference(x, params, *, eps):
    """Pure-JAX reference: original op order, same bf16-weight quantization."""
    xb = x.astype(jnp.float32).astype(jnp.bfloat16)
    w1 = params["w1"].astype(jnp.bfloat16)
    w3 = params["w3"].astype(jnp.bfloat16)
    w2 = params["w2"].astype(jnp.bfloat16)

    h1 = jnp.dot(xb, w1, preferred_element_type=jnp.float32) + params["b1"]
    h3 = jnp.dot(xb, w3, preferred_element_type=jnp.float32) + params["b3"]
    g = (h1 * jax.nn.sigmoid(h1)) * h3
    var = jnp.mean(g * g, axis=-1, keepdims=True)
    g = params["norm_w"] * (g * jax.lax.rsqrt(var + eps))
    out = jnp.dot(g.astype(jnp.bfloat16), w2,
                  preferred_element_type=jnp.float32) + params["b2"]
    return out.astype(x.dtype)


if __name__ == "__main__":
    # Small config consistent with UniViTARVisionConfig semantics:
    #   hidden_size=128, intermediate_size=384 -> inner_hidden_size = int(384*2/3) = 256
    hidden_size = 128
    intermediate_size = 384
    inner = int(intermediate_size * 2 / 3)
    eps = 1e-6
    seq = 512

    key = jax.random.PRNGKey(0)
    k = jax.random.split(key, 8)

    # Linear weights stored as [in, out] (transpose of torch.nn.Linear.weight)
    # so the kernel computes x @ W.
    params = {
        "w1": 0.02 * jax.random.normal(k[0], (hidden_size, inner), jnp.float32),
        "b1": 0.02 * jax.random.normal(k[1], (1, inner), jnp.float32),
        "w3": 0.02 * jax.random.normal(k[2], (hidden_size, inner), jnp.float32),
        "b3": 0.02 * jax.random.normal(k[3], (1, inner), jnp.float32),
        "norm_w": 1.0 + 0.01 * jax.random.normal(k[4], (1, inner), jnp.float32),
        "w2": 0.02 * jax.random.normal(k[5], (inner, hidden_size), jnp.float32),
        "b2": 0.02 * jax.random.normal(k[6], (1, hidden_size), jnp.float32),
    }
    x = jax.random.normal(k[7], (seq, hidden_size), jnp.float32)

    # chunk_i=128 exercises the I-chunked two-pass RMSNorm/fc2 path (2 chunks);
    # at production sizes the wrapper auto-picks a chunk <= 512 instead.
    out = swiglu_pallas(x, params, eps=eps, chunk_i=128)
    out = jax.block_until_ready(out)

    ref = swiglu_reference(x, params, eps=eps)
    assert out.shape == (seq, hidden_size)
    # Tolerance covers bf16 weight quantization + the norm_w-into-w2 fold
    # (which only changes where bf16 rounding happens).
    assert jnp.allclose(out, ref, atol=2e-2, rtol=2e-2), "mismatch vs reference"

    print("KERNEL_OK")
</pallas_src>

<mosaic_0001>
module attributes {stable_mosaic.version = 11 : i64} {
  func.func @swiglu_kernel(%arg0: i32, %arg1: memref<128x128xf32, #tpu.memory_space<vmem>>, %arg2: memref<128x512xbf16, #tpu.memory_space<vmem>>, %arg3: memref<1x512xf32, #tpu.memory_space<vmem>>, %arg4: memref<256x128xbf16, #tpu.memory_space<vmem>>, %arg5: memref<1x128xf32, #tpu.memory_space<vmem>>, %arg6: memref<128x128xf32, #tpu.memory_space<vmem>>, %arg7: memref<128x256xf32, #tpu.memory_space<vmem>>, %arg8: memref<128x128xf32, #tpu.memory_space<vmem>>) attributes {dimension_semantics = [#tpu.dimension_semantics<parallel>], iteration_bounds = array<i64: 4>, scalar_prefetch = 0 : i64, scratch_operands = 2 : i64, tpu.core_type = #tpu.core_type<tc>, window_params = [{transform_indices = @transform_0, window_bounds = array<i64: 128, 128>}, {pipeline_mode = #tpu.pipeline_mode<synchronous>, transform_indices = @transform_1, window_bounds = array<i64: 128, 512>}, {pipeline_mode = #tpu.pipeline_mode<synchronous>, transform_indices = @transform_2, window_bounds = array<i64: 1, 512>}, {pipeline_mode = #tpu.pipeline_mode<synchronous>, transform_indices = @transform_3, window_bounds = array<i64: 256, 128>}, {pipeline_mode = #tpu.pipeline_mode<synchronous>, transform_indices = @transform_4, window_bounds = array<i64: 1, 128>}, {transform_indices = @transform_5, window_bounds = array<i64: 128, 128>}]} {
    %c0 = arith.constant 0 : index
    %c0_0 = arith.constant 0 : index
    %0 = vector.load %arg1[%c0, %c0_0] : memref<128x128xf32, #tpu.memory_space<vmem>>, vector<128x128xf32>
    %1 = arith.truncf %0 : vector<128x128xf32> to vector<128x128xbf16>
    %cst = arith.constant 0.000000e+00 : f32
    %2 = vector.broadcast %cst : f32 to vector<128x1xf32>
    %c0_1 = arith.constant 0 : index
    %c0_2 = arith.constant 0 : index
    %3 = vector.load %arg2[%c0_1, %c0_2] : memref<128x512xbf16, #tpu.memory_space<vmem>>, vector<128x256xbf16>
    %cst_3 = arith.constant dense<0.000000e+00> : vector<128x256xf32>
    %4 = tpu.matmul %1, %3, %cst_3 {dimension_numbers = #tpu.dot_dimension_numbers<[1], [0], [0], [1], [0, 0, 1, 1], [], []>} : vector<128x128xbf16>, vector<128x256xbf16>, vector<128x256xf32> -> vector<128x256xf32>
    %c0_4 = arith.constant 0 : index
    %c0_5 = arith.constant 0 : index
    %5 = vector.load %arg3[%c0_4, %c0_5] : memref<1x512xf32, #tpu.memory_space<vmem>>, vector<1x256xf32>
    %6 = vector.broadcast %5 : vector<1x256xf32> to vector<128x256xf32>
    %7 = arith.addf %4, %6 : vector<128x256xf32>
    %8 = vector.extract_strided_slice %7 {offsets = [0, 0], sizes = [128, 128], strides = [1, 1]} : vector<128x256xf32> to vector<128x128xf32>
    %9 = vector.extract_strided_slice %7 {offsets = [0, 128], sizes = [128, 128], strides = [1, 1]} : vector<128x256xf32> to vector<128x128xf32>
    %10 = arith.negf %8 : vector<128x128xf32>
    %11 = math.exp %10 : vector<128x128xf32>
    %cst_6 = arith.constant 1.000000e+00 : f32
    %12 = vector.broadcast %cst_6 : f32 to vector<128x128xf32>
    %13 = arith.addf %12, %11 : vector<128x128xf32>
    %14 = arith.divf %12, %13 : vector<128x128xf32>
    %15 = arith.mulf %8, %14 : vector<128x128xf32>
    %16 = arith.mulf %15, %9 : vector<128x128xf32>
    %c0_7 = arith.constant 0 : index
    %c0_8 = arith.constant 0 : index
    %17 = vector.load %arg7[%c0_7, %c0_8] : memref<128x256xf32, #tpu.memory_space<vmem>>, vector<128x128xf32>
    tpu.vector_store %arg7[%c0_7, %c0_8], %16 {strides = array<i32>} : memref<128x256xf32, #tpu.memory_space<vmem>>, vector<128x128xf32>,
    %18 = arith.mulf %16, %16 : vector<128x128xf32>
    %cst_9 = arith.constant dense<0.000000e+00> : vector<128xf32>
    %19 = vector.multi_reduction <add>, %18, %cst_9 [1] : vector<128x128xf32> to vector<128xf32>
    %20 = vector.shape_cast %19 : vector<128xf32> to vector<128x1xf32>
    %21 = arith.addf %2, %20 : vector<128x1xf32>
    %c0_10 = arith.constant 0 : index
    %c256 = arith.constant 256 : index
    %22 = vector.load %arg2[%c0_10, %c256] : memref<128x512xbf16, #tpu.memory_space<vmem>>, vector<128x256xbf16>
    %cst_11 = arith.constant dense<0.000000e+00> : vector<128x256xf32>
    %23 = tpu.matmul %1, %22, %cst_11 {dimension_numbers = #tpu.dot_dimension_numbers<[1], [0], [0], [1], [0, 0, 1, 1], [], []>} : vector<128x128xbf16>, vector<128x256xbf16>, vector<128x256xf32> -> vector<128x256xf32>
    %c0_12 = arith.constant 0 : index
    %c256_13 = arith.constant 256 : index
    %24 = vector.load %arg3[%c0_12, %c256_13] : memref<1x512xf32, #tpu.memory_space<vmem>>, vector<1x256xf32>
    %25 = vector.broadcast %24 : vector<1x256xf32> to vector<128x256xf32>
    %26 = arith.addf %23, %25 : vector<128x256xf32>
    %27 = vector.extract_strided_slice %26 {offsets = [0, 0], sizes = [128, 128], strides = [1, 1]} : vector<128x256xf32> to vector<128x128xf32>
    %28 = vector.extract_strided_slice %26 {offsets = [0, 128], sizes = [128, 128], strides = [1, 1]} : vector<128x256xf32> to vector<128x128xf32>
    %29 = arith.negf %27 : vector<128x128xf32>
    %30 = math.exp %29 : vector<128x128xf32>
    %cst_14 = arith.constant 1.000000e+00 : f32
    %31 = vector.broadcast %cst_14 : f32 to vector<128x128xf32>
    %32 = arith.addf %31, %30 : vector<128x128xf32>
    %33 = arith.divf %31, %32 : vector<128x128xf32>
    %34 = arith.mulf %27, %33 : vector<128x128xf32>
    %35 = arith.mulf %34, %28 : vector<128x128xf32>
    %c0_15 = arith.constant 0 : index
    %c128 = arith.constant 128 : index
    %36 = vector.load %arg7[%c0_15, %c128] : memref<128x256xf32, #tpu.memory_space<vmem>>, vector<128x128xf32>
    tpu.vector_store %arg7[%c0_15, %c128], %35 {strides = array<i32>} : memref<128x256xf32, #tpu.memory_space<vmem>>, vector<128x128xf32>,
    %37 = arith.mulf %35, %35 : vector<128x128xf32>
    %cst_16 = arith.constant dense<0.000000e+00> : vector<128xf32>
    %38 = vector.multi_reduction <add>, %37, %cst_16 [1] : vector<128x128xf32> to vector<128xf32>
    %39 = vector.shape_cast %38 : vector<128xf32> to vector<128x1xf32>
    %40 = arith.addf %21, %39 : vector<128x1xf32>
    %cst_17 = arith.constant 3.906250e-03 : f32
    %41 = vector.broadcast %cst_17 : f32 to vector<128x1xf32>
    %42 = arith.mulf %40, %41 : vector<128x1xf32>
    %cst_18 = arith.constant 9.99999997E-7 : f32
    %43 = vector.broadcast %cst_18 : f32 to vector<128x1xf32>
    %44 = arith.addf %42, %43 : vector<128x1xf32>
    %45 = math.rsqrt %44 : vector<128x1xf32>
    %c0_19 = arith.constant 0 : index
    %c0_20 = arith.constant 0 : index
    %46 = vector.load %arg7[%c0_19, %c0_20] : memref<128x256xf32, #tpu.memory_space<vmem>>, vector<128x128xf32>
    %47 = vector.broadcast %45 : vector<128x1xf32> to vector<128x128xf32>
    %48 = arith.mulf %46, %47 : vector<128x128xf32>
    %49 = arith.truncf %48 : vector<128x128xf32> to vector<128x128xbf16>
    %c0_21 = arith.constant 0 : index
    %c0_22 = arith.constant 0 : index
    %50 = vector.load %arg4[%c0_21, %c0_22] : memref<256x128xbf16, #tpu.memory_space<vmem>>, vector<128x128xbf16>
    %cst_23 = arith.constant dense<0.000000e+00> : vector<128x128xf32>
    %51 = tpu.matmul %49, %50, %cst_23 {dimension_numbers = #tpu.dot_dimension_numbers<[1], [0], [0], [1], [0, 0, 1, 1], [], []>} : vector<128x128xbf16>, vector<128x128xbf16>, vector<128x128xf32> -> vector<128x128xf32>
    %c0_24 = arith.constant 0 : index
    %c0_25 = arith.constant 0 : index
    %52 = vector.load %arg8[%c0_24, %c0_25] : memref<128x128xf32, #tpu.memory_space<vmem>>, vector<128x128xf32>
    tpu.vector_store %arg8[%c0_24, %c0_25], %51 {strides = array<i32>} : memref<128x128xf32, #tpu.memory_space<vmem>>, vector<128x128xf32>,
    %c0_26 = arith.constant 0 : index
    %c128_27 = arith.constant 128 : index
    %53 = vector.load %arg7[%c0_26, %c128_27] : memref<128x256xf32, #tpu.memory_space<vmem>>, vector<128x128xf32>
    %54 = vector.broadcast %45 : vector<128x1xf32> to vector<128x128xf32>
    %55 = arith.mulf %53, %54 : vector<128x128xf32>
    %56 = arith.truncf %55 : vector<128x128xf32> to vector<128x128xbf16>
    %c128_28 = arith.constant 128 : index
    %c0_29 = arith.constant 0 : index
    %57 = vector.load %arg4[%c128_28, %c0_29] : memref<256x128xbf16, #tpu.memory_space<vmem>>, vector<128x128xbf16>
    %cst_30 = arith.constant dense<0.000000e+00> : vector<128x128xf32>
    %58 = tpu.matmul %56, %57, %cst_30 {dimension_numbers = #tpu.dot_dimension_numbers<[1], [0], [0], [1], [0, 0, 1, 1], [], []>} : vector<128x128xbf16>, vector<128x128xbf16>, vector<128x128xf32> -> vector<128x128xf32>
    %c0_31 = arith.constant 0 : index
    %c0_32 = arith.constant 0 : index
    %59 = vector.load %arg8[%c0_31, %c0_32] : memref<128x128xf32, #tpu.memory_space<vmem>>, vector<128x128xf32>
    %60 = arith.addf %59, %58 : vector<128x128xf32>
    %c0_33 = arith.constant 0 : index
    %c0_34 = arith.constant 0 : index
    %61 = vector.load %arg8[%c0_33, %c0_34] : memref<128x128xf32, #tpu.memory_space<vmem>>, vector<128x128xf32>
    tpu.vector_store %arg8[%c0_33, %c0_34], %60 {strides = array<i32>} : memref<128x128xf32, #tpu.memory_space<vmem>>, vector<128x128xf32>,
    %c0_35 = arith.constant 0 : index
    %c0_36 = arith.constant 0 : index
    %62 = vector.load %arg8[%c0_35, %c0_36] : memref<128x128xf32, #tpu.memory_space<vmem>>, vector<128x128xf32>
    %c0_37 = arith.constant 0 : index
    %c0_38 = arith.constant 0 : index
    %63 = vector.load %arg5[%c0_37, %c0_38] : memref<1x128xf32, #tpu.memory_space<vmem>>, vector<1x128xf32>
    %64 = vector.broadcast %63 : vector<1x128xf32> to vector<128x128xf32>
    %65 = arith.addf %62, %64 : vector<128x128xf32>
    %c0_39 = arith.constant 0 : index
    %c0_40 = arith.constant 0 : index
    %66 = vector.load %arg6[%c0_39, %c0_40] : memref<128x128xf32, #tpu.memory_space<vmem>>, vector<128x128xf32>
    tpu.vector_store %arg6[%c0_39, %c0_40], %65 {strides = array<i32>} : memref<128x128xf32, #tpu.memory_space<vmem>>, vector<128x128xf32>,
    return
  }
  func.func @transform_0(%arg0: i32) -> (i32, i32) {
    %c0_i32 = arith.constant 0 : i32
    %c0_i32_0 = arith.constant 0 : i32
    return %arg0, %c0_i32 : i32, i32
  }
  func.func @transform_1(%arg0: i32) -> (i32, i32) {
    %c0_i32 = arith.constant 0 : i32
    %c0_i32_0 = arith.constant 0 : i32
    %c0_i32_1 = arith.constant 0 : i32
    return %c0_i32, %c0_i32_0 : i32, i32
  }
  func.func @transform_2(%arg0: i32) -> (i32, i32) {
    %c0_i32 = arith.constant 0 : i32
    %c0_i32_0 = arith.constant 0 : i32
    %c0_i32_1 = arith.constant 0 : i32
    return %c0_i32, %c0_i32_0 : i32, i32
  }
  func.func @transform_3(%arg0: i32) -> (i32, i32) {
    %c0_i32 = arith.constant 0 : i32
    %c0_i32_0 = arith.constant 0 : i32
    %c0_i32_1 = arith.constant 0 : i32
    return %c0_i32, %c0_i32_0 : i32, i32
  }
  func.func @transform_4(%arg0: i32) -> (i32, i32) {
    %c0_i32 = arith.constant 0 : i32
    %c0_i32_0 = arith.constant 0 : i32
    %c0_i32_1 = arith.constant 0 : i32
    return %c0_i32, %c0_i32_0 : i32, i32
  }
  func.func @transform_5(%arg0: i32) -> (i32, i32) {
    %c0_i32 = arith.constant 0 : i32
    %c0_i32_0 = arith.constant 0 : i32
    return %arg0, %c0_i32 : i32, i32
  }
}

</mosaic_0001>

<llo_original>
// kernel: tpu_custom_call.1
$region0: #{tpu_custom_call.1}
  #allocation0 [shape = 'u32[]', space=smem, size = 0x4, offset = 0x4, fixed_abs, tag = 'smem constant byte address 0x4 - core index']
  #allocation1 [shape = 'u32[144,128]{1,0:T(1,128)}', space=vmem, size = 0x12000, scoped, tag = 'internal scratch']
  #allocation2 [shape = 'f32[128,256]{1,0:T(8,128)}', space=vmem, size = 0x20000, scoped, tag = 'scratch operand']
  #allocation3 [shape = 'f32[128,128]{1,0:T(8,128)}', space=vmem, size = 0x10000, scoped, tag = 'scratch operand']
  %s0 = inlined_call_operand.hbm [shape: f32[512,128], index: 0, kind: input, shape index: {}]
  %s1 = inlined_call_operand.hbm [shape: bf16[128,512], index: 1, kind: input, shape index: {}]
  %s2 = inlined_call_operand.vmem [shape: f32[1,512], index: 2, kind: input, shape index: {}]
  %s3 = inlined_call_operand.hbm [shape: bf16[256,128], index: 3, kind: input, shape index: {}]
  %s4 = inlined_call_operand.vmem [shape: f32[1,128], index: 4, kind: input, shape index: {}]
  %s5 = inlined_call_operand.hbm [shape: f32[512,128], index: 5, kind: output, shape index: {}]
  %s6 = sld [smem:[#allocation0]]
  $region65: #{tpu_custom_call.1} parent=0
    _
  %s8 = ssub.s32 1, %s6
  %s9 = scalar_select 0, %s8, %s6
  $region1: #{tpu_custom_call.1} parent=0
    #allocation4 [shape = 'u8[131072]{0}', space=vmem, size = 0x20000, scoped, tag = 'input window, operand 0']
    #allocation5 [shape = 's32[2]{0}', space=sflag, size = 0x8, scoped, tag = 'scoped memory for tpu_custom_call.1']
    #allocation6 [shape = 's32[2]{0}', space=sflag, size = 0x8, scoped, tag = 'scoped memory for tpu_custom_call.1']
    #allocation7 [shape = 'u8[131072]{0}', space=vmem, size = 0x20000, scoped, tag = 'input window, operand 1, single buffered']
    #allocation8 [shape = 's32[1]{0}', space=sflag, size = 0x4, scoped, tag = 'scoped memory for tpu_custom_call.1']
    #allocation9 [shape = 'u8[65536]{0}', space=vmem, size = 0x10000, scoped, tag = 'input window, operand 3, single buffered']
    #allocation10 [shape = 'u8[131072]{0}', space=vmem, size = 0x20000, scoped, tag = 'output window, operand 0']
    %10 = vsyncpa [#allocation5], 0
    %s11 = scalar_lea.sflag [#allocation5], 1
    %12 = vsyncpa %s11, 0
    %13 = vsyncpa [#allocation8], 0
    %14 = vsyncpa [#allocation6], 0
    %s15 = scalar_lea.sflag [#allocation6], 1
    %16 = vsyncpa %s15, 0
    loop: start=0, step=1, limit=6
    $region2: #{tpu_custom_call.1} parent=1 // loop_pre_header
      _
    $region3: #{tpu_custom_call.1} parent=1 // loop_header
      %s18 = sphi 0, %s22
      %p19 = scmp.ge.s32.totalorder %s18, 6
      %s28 = sphi 0, %s30
      %s31 = sphi 0, %s28
      %s32 = sphi 0, %s31
      %s48 = sphi 0, %s32
      %s52 = sphi 0, %s52
      %s54 = sphi 0, %s52
      %s55 = sphi 0, %s54
      %s69 = sphi 0, %s55
      %s73 = sphi 0, %s73
      %s75 = sphi 0, %s73
      %s76 = sphi 0, %s75
      %s90 = sphi 0, %s76
      %s94 = sphi 0, %s94
      %s96 = sphi 0, %s94
      %s97 = sphi 0, %s96
      %s111 = sphi 0, %s97
      %s115 = sphi 0, %s115
      %s117 = sphi 0, %s115
      %s118 = sphi 0, %s117
      %s132 = sphi 0, %s118
      %s138 = sphi 0, %s140
      %s141 = sphi 0, %s138
      %s142 = sphi 0, %s141
      %s158 = sphi 0, %s142
    $region4: #{tpu_custom_call.1} parent=1 // loop_header_branch
      %21 = sbr.rel (%p19) target = $region8
    $region5: #{tpu_custom_call.1} parent=1 // loop_body
      %s23 = ssub.s32 %s18, 1
      %s24 = ssub.s32 %s18, 2
      %s25 = sadd.s32 %s18, 1
      %s26 = ssub.s32 %s18, %s25
      %p27 = scmp.eq.s32.totalorder %s26, 0
      %s29 = sadd.s32 %s28, 1
      %s30 = scalar_select %p27, %s28, %s29
      %p33 = pneg %p27
      %p34 = scmp.eq.s32.totalorder %s18, 3
      %p35 = por %p33, %p34
      %p36 = scmp.ne.s32.totalorder %s28, %s31
      %p37 = scmp.eq.s32.totalorder %s18, 0
      %p38 = por %p36, %p37
      %p39 = scmp.ne.s32.totalorder %s28, %s31
      %p40 = scmp.eq.s32.totalorder %s23, 3
      %p41 = por %p39, %p40
      %p42 = scmp.ne.s32.totalorder %s31, %s32
      %p43 = scmp.eq.s32.totalorder %s23, 0
      %p44 = por %p42, %p43
      %p45 = scmp.ne.s32.totalorder %s31, %s32
      %p46 = scmp.eq.s32.totalorder %s24, 3
      %p47 = por %p45, %p46
      %p49 = scmp.ne.s32.totalorder %s32, %s48
      %p50 = scmp.eq.s32.totalorder %s24, 0
      %p51 = por %p49, %p50
      %s53 = sadd.s32 %s52, 1
      %p56 = scmp.eq.s32.totalorder %s18, 3
      %p57 = scmp.ne.s32.totalorder %s52, %s54
      %p58 = scmp.eq.s32.totalorder %s18, 0
      %p59 = por %p57, %p58
      %p60 = scmp.ne.s32.totalorder %s52, %s54
      %p61 = scmp.eq.s32.totalorder %s23, 3
      %p62 = por %p60, %p61
      %p63 = scmp.ne.s32.totalorder %s54, %s55
      %p64 = scmp.eq.s32.totalorder %s23, 0
      %p65 = por %p63, %p64
      %p66 = scmp.ne.s32.totalorder %s54, %s55
      %p67 = scmp.eq.s32.totalorder %s24, 3
      %p68 = por %p66, %p67
      %p70 = scmp.ne.s32.totalorder %s55, %s69
      %p71 = scmp.eq.s32.totalorder %s24, 0
      %p72 = por %p70, %p71
      %s74 = sadd.s32 %s73, 1
      %p77 = scmp.eq.s32.totalorder %s18, 3
      %p78 = scmp.ne.s32.totalorder %s73, %s75
      %p79 = scmp.eq.s32.totalorder %s18, 0
      %p80 = por %p78, %p79
      %p81 = scmp.ne.s32.totalorder %s73, %s75
      %p82 = scmp.eq.s32.totalorder %s23, 3
      %p83 = por %p81, %p82
      %p84 = scmp.ne.s32.totalorder %s75, %s76
      %p85 = scmp.eq.s32.totalorder %s23, 0
      %p86 = por %p84, %p85
      %p87 = scmp.ne.s32.totalorder %s75, %s76
      %p88 = scmp.eq.s32.totalorder %s24, 3
      %p89 = por %p87, %p88
      %p91 = scmp.ne.s32.totalorder %s76, %s90
      %p92 = scmp.eq.s32.totalorder %s24, 0
      %p93 = por %p91, %p92
      %s95 = sadd.s32 %s94, 1
      %p98 = scmp.eq.s32.totalorder %s18, 3
      %p99 = scmp.ne.s32.totalorder %s94, %s96
      %p100 = scmp.eq.s32.totalorder %s18, 0
      %p101 = por %p99, %p100
      %p102 = scmp.ne.s32.totalorder %s94, %s96
      %p103 = scmp.eq.s32.totalorder %s23, 3
      %p104 = por %p102, %p103
      %p105 = scmp.ne.s32.totalorder %s96, %s97
      %p106 = scmp.eq.s32.totalorder %s23, 0
      %p107 = por %p105, %p106
      %p108 = scmp.ne.s32.totalorder %s96, %s97
      %p109 = scmp.eq.s32.totalorder %s24, 3
      %p110 = por %p108, %p109
      %p112 = scmp.ne.s32.totalorder %s97, %s111
      %p113 = scmp.eq.s32.totalorder %s24, 0
      %p114 = por %p112, %p113
      %s116 = sadd.s32 %s115, 1
      %p119 = scmp.eq.s32.totalorder %s18, 3
      %p120 = scmp.ne.s32.totalorder %s115, %s117
      %p121 = scmp.eq.s32.totalorder %s18, 0
      %p122 = por %p120, %p121
      %p123 = scmp.ne.s32.totalorder %s115, %s117
      %p124 = scmp.eq.s32.totalorder %s23, 3
      %p125 = por %p123, %p124
      %p126 = scmp.ne.s32.totalorder %s117, %s118
      %p127 = scmp.eq.s32.totalorder %s23, 0
      %p128 = por %p126, %p127
      %p129 = scmp.ne.s32.totalorder %s117, %s118
      %p130 = scmp.eq.s32.totalorder %s24, 3
      %p131 = por %p129, %p130
      %p133 = scmp.ne.s32.totalorder %s118, %s132
      %p134 = scmp.eq.s32.totalorder %s24, 0
      %p135 = por %p133, %p134
      %s136 = ssub.s32 %s18, %s25
      %p137 = scmp.eq.s32.totalorder %s136, 0
      %s139 = sadd.s32 %s138, 1
      %s140 = scalar_select %p137, %s138, %s139
      %p143 = pneg %p137
      %p144 = scmp.eq.s32.totalorder %s18, 3
      %p145 = por %p143, %p144
      %p146 = scmp.ne.s32.totalorder %s138, %s141
      %p147 = scmp.eq.s32.totalorder %s18, 0
      %p148 = por %p146, %p147
      %p149 = scmp.ne.s32.totalorder %s138, %s141
      %p150 = scmp.eq.s32.totalorder %s23, 3
      %p151 = por %p149, %p150
      %p152 = scmp.ne.s32.totalorder %s141, %s142
      %p153 = scmp.eq.s32.totalorder %s23, 0
      %p154 = por %p152, %p153
      %p155 = scmp.ne.s32.totalorder %s141, %s142
      %p156 = scmp.eq.s32.totalorder %s24, 3
      %p157 = por %p155, %p156
      %p159 = scmp.ne.s32.totalorder %s142, %s158
      %p160 = scmp.eq.s32.totalorder %s24, 0
      %p161 = por %p159, %p160
      %p162 = scmp.le.s32.totalorder 1, %s18
      %p163 = scmp.lt.s32.totalorder %s18, 5
      %p164 = pnand %p162, %p163
      %p165 = pneg %p164
      // Predicated region
      $region9: #{tpu_custom_call.1} parent=5 // pred_check
        _
      $region10: #{tpu_custom_call.1} parent=5 // pred_check_branch
        %167 = sbr.rel (%p164) target = $region12
      $region11: #{tpu_custom_call.1} parent=5 // pred_region
        %s168 = ssub.s32 %s18, 1
        // Predicated region
        $region13: #{tpu_custom_call.1} parent=11 // pred_check
          %p169 = pneg %p65
        $region14: #{tpu_custom_call.1} parent=11 // pred_check_branch
          %171 = sbr.rel (%p169) target = $region16
        $region15: #{tpu_custom_call.1} parent=11 // pred_region
          %s173 = ssub.s32 4096, 4096
          %174 = vsyncadd [#allocation8], %s173
          %s175 = sshll.u32 [#allocation7], 4
          %s176 = int_to_ptr.vmem [resolvable:$true] %s175
          %181 = dma.hbm_to_vmem [thread:$0]  %s1, 4096, %s176, [#allocation8], 256, 256, 16
        $region16: #{tpu_custom_call.1} parent=11 // pred_fallthru
          _
        // Predicated region
        $region17: #{tpu_custom_call.1} parent=11 // pred_check
          %p182 = pneg %p86
        $region18: #{tpu_custom_call.1} parent=11 // pred_check_branch
          %184 = sbr.rel (%p182) target = $region20
        $region19: #{tpu_custom_call.1} parent=11 // pred_region
          _
        $region20: #{tpu_custom_call.1} parent=11 // pred_fallthru
          _
        // Predicated region
        $region21: #{tpu_custom_call.1} parent=11 // pred_check
          %p185 = pneg %p107
        $region22: #{tpu_custom_call.1} parent=11 // pred_check_branch
          %187 = sbr.rel (%p185) target = $region24
        $region23: #{tpu_custom_call.1} parent=11 // pred_region
          %s189 = ssub.s32 2048, 2048
          %190 = vsyncadd [#allocation8], %s189
          %s191 = sshll.u32 [#allocation9], 4
          %s192 = int_to_ptr.vmem [resolvable:$true] %s191
          %197 = dma.hbm_to_vmem [thread:$0]  %s3, 2048, %s192, [#allocation8], 64, 64, 4
        $region24: #{tpu_custom_call.1} parent=11 // pred_fallthru
          _
        // Predicated region
        $region25: #{tpu_custom_call.1} parent=11 // pred_check
          %p198 = pneg %p128
        $region26: #{tpu_custom_call.1} parent=11 // pred_check_branch
          %200 = sbr.rel (%p198) target = $region28
        $region27: #{tpu_custom_call.1} parent=11 // pred_region
          _
        $region28: #{tpu_custom_call.1} parent=11 // pred_fallthru
          _
      $region12: #{tpu_custom_call.1} parent=5 // pred_fallthru
        _
      %p201 = scmp.lt.s32.totalorder %s18, 4
      // Predicated region
      $region29: #{tpu_custom_call.1} parent=5 // pred_check
        %p202 = pneg %p201
      $region30: #{tpu_custom_call.1} parent=5 // pred_check_branch
        %204 = sbr.rel (%p202) target = $region32
      $region31: #{tpu_custom_call.1} parent=5 // pred_region
        // Predicated region
        $region33: #{tpu_custom_call.1} parent=31 // pred_check
          %p205 = pneg %p38
        $region34: #{tpu_custom_call.1} parent=31 // pred_check_branch
          %207 = sbr.rel (%p205) target = $region36
        $region35: #{tpu_custom_call.1} parent=31 // pred_region
          %s208 = sand.u32 %s28, 1
          %s209 = scalar_lea.sflag [#allocation5], %s208
          %s210 = sand.u32 %s28, 1
          %s211 = smul.addr %s210, 128
          %s212 = scalar_lea.vmem [#allocation4], %s211
          %s213 = smul.u32 16, %s18
          %s215 = ssub.s32 2048, 2048
          %216 = vsyncadd %s209, %s215
          %s217 = smul.addr %s213, 128
          %s218 = scalar_lea.hbm %s0, %s217
          %s219 = sshll.u32 %s212, 4
          %s220 = int_to_ptr.vmem [resolvable:$true] %s219
          %225 = dma.hbm_to_vmem [thread:$0]  %s218, 2048, %s220, %s209, 128, 128, 8
        $region36: #{tpu_custom_call.1} parent=31 // pred_fallthru
          _
      $region32: #{tpu_custom_call.1} parent=5 // pred_fallthru
        _
      %p226 = scmp.le.s32.totalorder 1, %s18
      %p227 = scmp.lt.s32.totalorder %s18, 5
      %p228 = pnand %p226, %p227
      %p229 = pneg %p228
      // Predicated region
      $region37: #{tpu_custom_call.1} parent=5 // pred_check
        _
      $region38: #{tpu_custom_call.1} parent=5 // pred_check_branch
        %231 = sbr.rel (%p228) target = $region40
      $region39: #{tpu_custom_call.1} parent=5 // pred_region
        %s232 = ssub.s32 %s18, 1
        %s233 = sand.u32 %s31, 1
        %s234 = scalar_lea.sflag [#allocation5], %s233
        %s235 = sand.u32 %s31, 1
        %s236 = smul.addr %s235, 128
        %s237 = scalar_lea.vmem [#allocation4], %s236
        // Predicated region
        $region41: #{tpu_custom_call.1} parent=39 // pred_check
          %p238 = pneg %p44
        $region42: #{tpu_custom_call.1} parent=39 // pred_check_branch
          %240 = sbr.rel (%p238) target = $region44
        $region43: #{tpu_custom_call.1} parent=39 // pred_region
          %241 = dma.done %s234, 2048
        $region44: #{tpu_custom_call.1} parent=39 // pred_fallthru
          _
        // Predicated region
        $region45: #{tpu_custom_call.1} parent=39 // pred_check
          %p242 = pneg %p65
        $region46: #{tpu_custom_call.1} parent=39 // pred_check_branch
          %244 = sbr.rel (%p242) target = $region48
        $region47: #{tpu_custom_call.1} parent=39 // pred_region
          %245 = dma.done [#allocation8], 4096
        $region48: #{tpu_custom_call.1} parent=39 // pred_fallthru
          _
        // Predicated region
        $region49: #{tpu_custom_call.1} parent=39 // pred_check
          %p246 = pneg %p107
        $region50: #{tpu_custom_call.1} parent=39 // pred_check_branch
          %248 = sbr.rel (%p246) target = $region52
        $region51: #{tpu_custom_call.1} parent=39 // pred_region
          %249 = dma.done [#allocation8], 2048
        $region52: #{tpu_custom_call.1} parent=39 // pred_fallthru
          _
        %s250 = sand.u32 %s31, 1
        %s251 = scalar_lea.sflag [#allocation5], %s250
        %s252 = sand.u32 %s31, 1
        %s253 = smul.addr %s252, 128
        %s254 = scalar_lea.vmem [#allocation4], %s253
        %p255 = pneg %p44
        %p256 = pneg %p41
        %p257 = pneg %p65
        %p258 = pneg %p62
        %p259 = pneg %p86
        %p260 = pneg %p83
        %p261 = pneg %p107
        %p262 = pneg %p104
        %p263 = pneg %p128
        %p264 = pneg %p125
        %p265 = pneg %p154
        %p266 = pneg %p151
        %s267 = sand.u32 %s141, 1
        %s268 = scalar_lea.sflag [#allocation6], %s267
        %s269 = sand.u32 %s141, 1
        %s270 = smul.addr %s269, 128
        %s271 = scalar_lea.vmem [#allocation10], %s270
        %s272 = smul.u32 16, %s23
        %s273 = smul.u32 16, %s23
        %v275 = vld [vmem:[%s237] sm:$0xff]
        %v276 = vld [vmem:[%s237 + $0x8] sm:$0xff]
        %v277 = vld [vmem:[%s237 + $0x10] sm:$0xff]
        %v278 = vld [vmem:[%s237 + $0x18] sm:$0xff]
        %v279 = vld [vmem:[%s237 + $0x20] sm:$0xff]
        %v280 = vld [vmem:[%s237 + $0x28] sm:$0xff]
        %v281 = vld [vmem:[%s237 + $0x30] sm:$0xff]
        %v282 = vld [vmem:[%s237 + $0x38] sm:$0xff]
        %v283 = vld [vmem:[%s237 + $0x40] sm:$0xff]
        %v284 = vld [vmem:[%s237 + $0x48] sm:$0xff]
        %v285 = vld [vmem:[%s237 + $0x50] sm:$0xff]
        %v286 = vld [vmem:[%s237 + $0x58] sm:$0xff]
        %v287 = vld [vmem:[%s237 + $0x60] sm:$0xff]
        %v288 = vld [vmem:[%s237 + $0x68] sm:$0xff]
        %v289 = vld [vmem:[%s237 + $0x70] sm:$0xff]
        %v290 = vld [vmem:[%s237 + $0x78] sm:$0xff]
        %v291 = vpack.c.bf16 %v276, %v275
        %v292 = vpack.c.bf16 %v278, %v277
        %v293 = vpack.c.bf16 %v280, %v279
        %v294 = vpack.c.bf16 %v282, %v281
        %v295 = vpack.c.bf16 %v284, %v283
        %v296 = vpack.c.bf16 %v286, %v285
        %v297 = vpack.c.bf16 %v288, %v287
        %v298 = vpack.c.bf16 %v290, %v289
        %v299 = vld [vmem:[#allocation7] sm:$0xff]
        %v300 = vld [vmem:[#allocation7 + $0x10] sm:$0xff]
        %v301 = vld [vmem:[#allocation7 + $0x20] sm:$0xff]
        %v302 = vld [vmem:[#allocation7 + $0x30] sm:$0xff]
        %v303 = vld [vmem:[#allocation7 + $0x40] sm:$0xff]
        %v304 = vld [vmem:[#allocation7 + $0x50] sm:$0xff]
        %v305 = vld [vmem:[#allocation7 + $0x60] sm:$0xff]
        %v306 = vld [vmem:[#allocation7 + $0x70] sm:$0xff]
        %v307 = vld [vmem:[#allocation7 + $0x80] sm:$0xff]
        %v308 = vld [vmem:[#allocation7 + $0x90] sm:$0xff]
        %v309 = vld [vmem:[#allocation7 + $0xa0] sm:$0xff]
        %v310 = vld [vmem:[#allocation7 + $0xb0] sm:$0xff]
        %v311 = vld [vmem:[#allocation7 + $0xc0] sm:$0xff]
        %v312 = vld [vmem:[#allocation7 + $0xd0] sm:$0xff]
        %v313 = vld [vmem:[#allocation7 + $0xe0] sm:$0xff]
        %v314 = vld [vmem:[#allocation7 + $0xf0] sm:$0xff]
        %v315 = vld [vmem:[%s2] sm:$0x3]
        %v317 = vlaneseq
        %v318 = vshrl.u32 %v317, 7
        %v319 = vsub.s32 0, %v318
        %v320 = vrot.slane %v315, %v319
        %v321 = vlaneseq
        %v322 = vshrl.u32 %v321, 7
        %v323 = vsub.s32 1, %v322
        %v324 = vrot.slane %v315, %v323
        %v343 = vunpack.c.l.b16 %v299
        %v344 = vunpack.c.h.b16 %v299
        %v345 = vunpack.c.l.b16 %v300
        %v346 = vunpack.c.h.b16 %v300
        %v347 = vunpack.c.l.b16 %v301
        %v348 = vunpack.c.h.b16 %v301
        %v349 = vunpack.c.l.b16 %v302
        %v350 = vunpack.c.h.b16 %v302
        %v351 = vunpack.c.l.b16 %v303
        %v352 = vunpack.c.h.b16 %v303
        %v353 = vunpack.c.l.b16 %v304
        %v354 = vunpack.c.h.b16 %v304
        %v355 = vunpack.c.l.b16 %v305
        %v356 = vunpack.c.h.b16 %v305
        %v357 = vunpack.c.l.b16 %v306
        %v358 = vunpack.c.h.b16 %v306
        %v359 = vunpack.c.l.b16 %v307
        %v360 = vunpack.c.h.b16 %v307
        %v361 = vunpack.c.l.b16 %v308
        %v362 = vunpack.c.h.b16 %v308
        %v363 = vunpack.c.l.b16 %v309
        %v364 = vunpack.c.h.b16 %v309
        %v365 = vunpack.c.l.b16 %v310
        %v366 = vunpack.c.h.b16 %v310
        %v367 = vunpack.c.l.b16 %v311
        %v368 = vunpack.c.h.b16 %v311
        %v369 = vunpack.c.l.b16 %v312
        %v370 = vunpack.c.h.b16 %v312
        %v371 = vunpack.c.l.b16 %v313
        %v372 = vunpack.c.h.b16 %v313
        %v373 = vunpack.c.l.b16 %v314
        %v374 = vunpack.c.h.b16 %v314
        %v375 = vpack.c.b16 %v345, %v343
        %v376 = vpack.c.b16 %v346, %v344
        %v377 = vpack.c.b16 %v349, %v347
        %v378 = vpack.c.b16 %v350, %v348
        %v379 = vpack.c.b16 %v353, %v351
        %v380 = vpack.c.b16 %v354, %v352
        %v381 = vpack.c.b16 %v357, %v355
        %v382 = vpack.c.b16 %v358, %v356
        %v383 = vpack.c.b16 %v361, %v359
        %v384 = vpack.c.b16 %v362, %v360
        %v385 = vpack.c.b16 %v365, %v363
        %v386 = vpack.c.b16 %v366, %v364
        %v387 = vpack.c.b16 %v369, %v367
        %v388 = vpack.c.b16 %v370, %v368
        %v389 = vpack.c.b16 %v373, %v371
        %v390 = vpack.c.b16 %v374, %v372
        %407 = vmatprep.subr.bf16.mxu0 %v376
        %408 = vmatpush1.bf16.msra.mxu0 %v375
        %409 = vmatprep.subr.bf16.mxu0 %v378
        %410 = vmatpush1.bf16.msra.mxu0 %v377
        %411 = vmatprep.subr.bf16.mxu0 %v380
        %412 = vmatpush1.bf16.msra.mxu0 %v379
        %413 = vmatprep.subr.bf16.mxu0 %v382
        %414 = vmatpush1.bf16.msra.mxu0 %v381
        %415 = vmatprep.subr.bf16.mxu0 %v384
        %416 = vmatpush1.bf16.msra.mxu0 %v383
        %417 = vmatprep.subr.bf16.mxu0 %v386
        %418 = vmatpush1.bf16.msra.mxu0 %v385
        %419 = vmatprep.subr.bf16.mxu0 %v388
        %420 = vmatpush1.bf16.msra.mxu0 %v387
        %421 = vmatprep.subr.bf16.mxu0 %v390
        %422 = vmatpush1.bf16.msra.mxu0 %v389
        %423 = vmatprep.subr.bf16.mxu0 0
        %424 = vmatpush1.bf16.msra.mxu0 0
        %425 = vmatprep.subr.bf16.mxu0 0
        %426 = vmatpush1.bf16.msra.mxu0 0
        %427 = vmatprep.subr.bf16.mxu0 0
        %428 = vmatpush1.bf16.msra.mxu0 0
        %429 = vmatprep.subr.bf16.mxu0 0
        %430 = vmatpush1.bf16.msra.mxu0 0
        %431 = vmatprep.subr.bf16.mxu0 0
        %432 = vmatpush1.bf16.msra.mxu0 0
        %433 = vmatprep.subr.bf16.mxu0 0
        %434 = vmatpush1.bf16.msra.mxu0 0
        %435 = vmatprep.subr.bf16.mxu0 0
        %436 = vmatpush1.bf16.msra.mxu0 0
        %437 = vmatprep.subr.bf16.mxu0 0
        %438 = vmatpush1.bf16.msra.mxu0 0
        %439 = vmatprep.mubr.bf16.mxu0 0
        %440 = vmatmul.mubr.bf16.gmra.mrb[0].mxu0 %v291
        %v441 = vpop.f32.mrb[0].mxu0
        %v442 = vadd.f32 %v320, %v441
        %v443 = vpop.f32.mrb[0].mxu0
        %v444 = vadd.f32 %v324, %v443
        %v445 = vpop.f32.mrb[0].mxu0
        %v446 = vadd.f32 %v320, %v445
        %v447 = vpop.f32.mrb[0].mxu0
        %v448 = vadd.f32 %v324, %v447
        %449 = vmatprep.mubr.bf16.mxu0 0
        %450 = vmatmul.mubr.bf16.gmra.mrb[0].mxu0 %v292
        %v451 = vpop.f32.mrb[0].mxu0
        %v452 = vadd.f32 %v320, %v451
        %v453 = vpop.f32.mrb[0].mxu0
        %v454 = vadd.f32 %v324, %v453
        %v455 = vpop.f32.mrb[0].mxu0
        %v456 = vadd.f32 %v320, %v455
        %v457 = vpop.f32.mrb[0].mxu0
        %v458 = vadd.f32 %v324, %v457
        %459 = vmatprep.mubr.bf16.mxu0 0
        %460 = vmatmul.mubr.bf16.gmra.mrb[0].mxu0 %v293
        %v461 = vpop.f32.mrb[0].mxu0
        %v462 = vadd.f32 %v320, %v461
        %v463 = vpop.f32.mrb[0].mxu0
        %v464 = vadd.f32 %v324, %v463
        %v465 = vpop.f32.mrb[0].mxu0
        %v466 = vadd.f32 %v320, %v465
        %v467 = vpop.f32.mrb[0].mxu0
        %v468 = vadd.f32 %v324, %v467
        %469 = vmatprep.mubr.bf16.mxu0 0
        %470 = vmatmul.mubr.bf16.gmra.mrb[0].mxu0 %v294
        %v471 = vpop.f32.mrb[0].mxu0
        %v472 = vadd.f32 %v320, %v471
        %v473 = vpop.f32.mrb[0].mxu0
        %v474 = vadd.f32 %v324, %v473
        %v475 = vpop.f32.mrb[0].mxu0
        %v476 = vadd.f32 %v320, %v475
        %v477 = vpop.f32.mrb[0].mxu0
        %v478 = vadd.f32 %v324, %v477
        %479 = vmatprep.mubr.bf16.mxu0 0
        %480 = vmatmul.mubr.bf16.gmra.mrb[0].mxu0 %v295
        %v481 = vpop.f32.mrb[0].mxu0
        %v482 = vadd.f32 %v320, %v481
        %v483 = vpop.f32.mrb[0].mxu0
        %v484 = vadd.f32 %v324, %v483
        %v485 = vpop.f32.mrb[0].mxu0
        %v486 = vadd.f32 %v320, %v485
        %v487 = vpop.f32.mrb[0].mxu0
        %v488 = vadd.f32 %v324, %v487
        %489 = vmatprep.mubr.bf16.mxu0 0
        %490 = vmatmul.mubr.bf16.gmra.mrb[0].mxu0 %v296
        %v491 = vpop.f32.mrb[0].mxu0
        %v492 = vadd.f32 %v320, %v491
        %v493 = vpop.f32.mrb[0].mxu0
        %v494 = vadd.f32 %v324, %v493
        %v495 = vpop.f32.mrb[0].mxu0
        %v496 = vadd.f32 %v320, %v495
        %v497 = vpop.f32.mrb[0].mxu0
        %v498 = vadd.f32 %v324, %v497
        %499 = vmatprep.mubr.bf16.mxu0 0
        %500 = vmatmul.mubr.bf16.gmra.mrb[0].mxu0 %v297
        %v501 = vpop.f32.mrb[0].mxu0
        %v502 = vadd.f32 %v320, %v501
        %v503 = vpop.f32.mrb[0].mxu0
        %v504 = vadd.f32 %v324, %v503
        %v505 = vpop.f32.mrb[0].mxu0
        %v506 = vadd.f32 %v320, %v505
        %v507 = vpop.f32.mrb[0].mxu0
        %v508 = vadd.f32 %v324, %v507
        %509 = vmatprep.mubr.bf16.mxu0 0
        %510 = vmatmul.mubr.bf16.gmra.mrb[0].mxu0 %v298
        %v511 = vpop.f32.mrb[0].mxu0
        %v512 = vadd.f32 %v320, %v511
        %v513 = vpop.f32.mrb[0].mxu0
        %v514 = vadd.f32 %v324, %v513
        %v515 = vpop.f32.mrb[0].mxu0
        %v516 = vadd.f32 %v320, %v515
        %v517 = vpop.f32.mrb[0].mxu0
        %v518 = vadd.f32 %v324, %v517
        %519 = vdwg.mxu0
        %v520 = vxor.u32 %v442, 2147483648
        %v521 = vxor.u32 %v446, 2147483648
        %v522 = vxor.u32 %v452, 2147483648
        %v523 = vxor.u32 %v456, 2147483648
        %v524 = vxor.u32 %v462, 2147483648
        %v525 = vxor.u32 %v466, 2147483648
        %v526 = vxor.u32 %v472, 2147483648
        %v527 = vxor.u32 %v476, 2147483648
        %v528 = vxor.u32 %v482, 2147483648
        %v529 = vxor.u32 %v486, 2147483648
        %v530 = vxor.u32 %v492, 2147483648
        %v531 = vxor.u32 %v496, 2147483648
        %v532 = vxor.u32 %v502, 2147483648
        %v533 = vxor.u32 %v506, 2147483648
        %v534 = vxor.u32 %v512, 2147483648
        %v535 = vxor.u32 %v516, 2147483648
        %v536 = vmul.f32 %v520, 1.442695
        %v537 = vpow.pop %v536
        %v538 = vmul.f32 %v521, 1.442695
        %v539 = vpow.pop %v538
        %v540 = vmul.f32 %v522, 1.442695
        %v541 = vpow.pop %v540
        %v542 = vmul.f32 %v523, 1.442695
        %v543 = vpow.pop %v542
        %v544 = vmul.f32 %v524, 1.442695
        %v545 = vpow.pop %v544
        %v546 = vmul.f32 %v525, 1.442695
        %v547 = vpow.pop %v546
        %v548 = vmul.f32 %v526, 1.442695
        %v549 = vpow.pop %v548
        %v550 = vmul.f32 %v527, 1.442695
        %v551 = vpow.pop %v550
        %v552 = vmul.f32 %v528, 1.442695
        %v553 = vpow.pop %v552
        %v554 = vmul.f32 %v529, 1.442695
        %v555 = vpow.pop %v554
        %v556 = vmul.f32 %v530, 1.442695
        %v557 = vpow.pop %v556
        %v558 = vmul.f32 %v531, 1.442695
        %v559 = vpow.pop %v558
        %v560 = vmul.f32 %v532, 1.442695
        %v561 = vpow.pop %v560
        %v562 = vmul.f32 %v533, 1.442695
        %v563 = vpow.pop %v562
        %v564 = vmul.f32 %v534, 1.442695
        %v565 = vpow.pop %v564
        %v566 = vmul.f32 %v535, 1.442695
        %v567 = vpow.pop %v566
        %v568 = vadd.f32 %v537, 1.0
        %v569 = vadd.f32 %v539, 1.0
        %v570 = vadd.f32 %v541, 1.0
        %v571 = vadd.f32 %v543, 1.0
        %v572 = vadd.f32 %v545, 1.0
        %v573 = vadd.f32 %v547, 1.0
        %v574 = vadd.f32 %v549, 1.0
        %v575 = vadd.f32 %v551, 1.0
        %v576 = vadd.f32 %v553, 1.0
        %v577 = vadd.f32 %v555, 1.0
        %v578 = vadd.f32 %v557, 1.0
        %v579 = vadd.f32 %v559, 1.0
        %v580 = vadd.f32 %v561, 1.0
        %v581 = vadd.f32 %v563, 1.0
        %v582 = vadd.f32 %v565, 1.0
        %v583 = vadd.f32 %v567, 1.0
        %v584 = vrcp.pop %v568
        %v585 = vmul.f32 1.0, %v584
        %v586 = vrcp.pop %v569
        %v587 = vmul.f32 1.0, %v586
        %v588 = vrcp.pop %v570
        %v589 = vmul.f32 1.0, %v588
        %v590 = vrcp.pop %v571
        %v591 = vmul.f32 1.0, %v590
        %v592 = vrcp.pop %v572
        %v593 = vmul.f32 1.0, %v592
        %v594 = vrcp.pop %v573
        %v595 = vmul.f32 1.0, %v594
        %v596 = vrcp.pop %v574
        %v597 = vmul.f32 1.0, %v596
        %v598 = vrcp.pop %v575
        %v599 = vmul.f32 1.0, %v598
        %v600 = vrcp.pop %v576
        %v601 = vmul.f32 1.0, %v600
        %v602 = vrcp.pop %v577
        %v603 = vmul.f32 1.0, %v602
        %v604 = vrcp.pop %v578
        %v605 = vmul.f32 1.0, %v604
        %v606 = vrcp.pop %v579
        %v607 = vmul.f32 1.0, %v606
        %v608 = vrcp.pop %v580
        %v609 = vmul.f32 1.0, %v608
        %v610 = vrcp.pop %v581
        %v611 = vmul.f32 1.0, %v610
        %v612 = vrcp.pop %v582
        %v613 = vmul.f32 1.0, %v612
        %v614 = vrcp.pop %v583
        %v615 = vmul.f32 1.0, %v614
        %v616 = vmul.f32 %v442, %v585
        %v617 = vmul.f32 %v446, %v587
        %v618 = vmul.f32 %v452, %v589
        %v619 = vmul.f32 %v456, %v591
        %v620 = vmul.f32 %v462, %v593
        %v621 = vmul.f32 %v466, %v595
        %v622 = vmul.f32 %v472, %v597
        %v623 = vmul.f32 %v476, %v599
        %v624 = vmul.f32 %v482, %v601
        %v625 = vmul.f32 %v486, %v603
        %v626 = vmul.f32 %v492, %v605
        %v627 = vmul.f32 %v496, %v607
        %v628 = vmul.f32 %v502, %v609
        %v629 = vmul.f32 %v506, %v611
        %v630 = vmul.f32 %v512, %v613
        %v631 = vmul.f32 %v516, %v615
        %v632 = vmul.f32 %v616, %v444
        %v633 = vmul.f32 %v617, %v448
        %v634 = vmul.f32 %v618, %v454
        %v635 = vmul.f32 %v619, %v458
        %v636 = vmul.f32 %v620, %v464
        %v637 = vmul.f32 %v621, %v468
        %v638 = vmul.f32 %v622, %v474
        %v639 = vmul.f32 %v623, %v478
        %v640 = vmul.f32 %v624, %v484
        %v641 = vmul.f32 %v625, %v488
        %v642 = vmul.f32 %v626, %v494
        %v643 = vmul.f32 %v627, %v498
        %v644 = vmul.f32 %v628, %v504
        %v645 = vmul.f32 %v629, %v508
        %v646 = vmul.f32 %v630, %v514
        %v647 = vmul.f32 %v631, %v518
        %648 = vst [vmem:[#allocation2] sm:$0xff] %v632
        %649 = vst [vmem:[#allocation2 + $0x10] sm:$0xff] %v633
        %650 = vst [vmem:[#allocation2 + $0x20] sm:$0xff] %v634
        %651 = vst [vmem:[#allocation2 + $0x30] sm:$0xff] %v635
        %652 = vst [vmem:[#allocation2 + $0x40] sm:$0xff] %v636
        %653 = vst [vmem:[#allocation2 + $0x50] sm:$0xff] %v637
        %654 = vst [vmem:[#allocation2 + $0x60] sm:$0xff] %v638
        %655 = vst [vmem:[#allocation2 + $0x70] sm:$0xff] %v639
        %656 = vst [vmem:[#allocation2 + $0x80] sm:$0xff] %v640
        %657 = vst [vmem:[#allocation2 + $0x90] sm:$0xff] %v641
        %658 = vst [vmem:[#allocation2 + $0xa0] sm:$0xff] %v642
        %659 = vst [vmem:[#allocation2 + $0xb0] sm:$0xff] %v643
        %660 = vst [vmem:[#allocation2 + $0xc0] sm:$0xff] %v644
        %661 = vst [vmem:[#allocation2 + $0xd0] sm:$0xff] %v645
        %662 = vst [vmem:[#allocation2 + $0xe0] sm:$0xff] %v646
        %663 = vst [vmem:[#allocation2 + $0xf0] sm:$0xff] %v647
        %v664 = vmul.f32 %v632, %v632
        %v665 = vmul.f32 %v633, %v633
        %v666 = vmul.f32 %v634, %v634
        %v667 = vmul.f32 %v635, %v635
        %v668 = vmul.f32 %v636, %v636
        %v669 = vmul.f32 %v637, %v637
        %v670 = vmul.f32 %v638, %v638
        %v671 = vmul.f32 %v639, %v639
        %v672 = vmul.f32 %v640, %v640
        %v673 = vmul.f32 %v641, %v641
        %v674 = vmul.f32 %v642, %v642
        %v675 = vmul.f32 %v643, %v643
        %v676 = vmul.f32 %v644, %v644
        %v677 = vmul.f32 %v645, %v645
        %v678 = vmul.f32 %v646, %v646
        %v679 = vmul.f32 %v647, %v647
        %680 = vadd.xlane.f32.xlu0 %v664
        %v681 = vpop.xlane.xlu0 %680
        %682 = vadd.xlane.f32.xlu0 %v665
        %v683 = vpop.xlane.xlu0 %682
        %684 = vadd.xlane.f32.xlu0 %v666
        %v685 = vpop.xlane.xlu0 %684
        %686 = vadd.xlane.f32.xlu0 %v667
        %v687 = vpop.xlane.xlu0 %686
        %688 = vadd.xlane.f32.xlu0 %v668
        %v689 = vpop.xlane.xlu0 %688
        %690 = vadd.xlane.f32.xlu0 %v669
        %v691 = vpop.xlane.xlu0 %690
        %692 = vadd.xlane.f32.xlu0 %v670
        %v693 = vpop.xlane.xlu0 %692
        %694 = vadd.xlane.f32.xlu0 %v671
        %v695 = vpop.xlane.xlu0 %694
        %696 = vadd.xlane.f32.xlu0 %v672
        %v697 = vpop.xlane.xlu0 %696
        %698 = vadd.xlane.f32.xlu0 %v673
        %v699 = vpop.xlane.xlu0 %698
        %700 = vadd.xlane.f32.xlu0 %v674
        %v701 = vpop.xlane.xlu0 %700
        %702 = vadd.xlane.f32.xlu0 %v675
        %v703 = vpop.xlane.xlu0 %702
        %704 = vadd.xlane.f32.xlu0 %v676
        %v705 = vpop.xlane.xlu0 %704
        %706 = vadd.xlane.f32.xlu0 %v677
        %v707 = vpop.xlane.xlu0 %706
        %708 = vadd.xlane.f32.xlu0 %v678
        %v709 = vpop.xlane.xlu0 %708
        %710 = vadd.xlane.f32.xlu0 %v679
        %v711 = vpop.xlane.xlu0 %710
        %v712 = vadd.f32 %v681, 0.0
        %v713 = vadd.f32 %v683, 0.0
        %v714 = vadd.f32 %v685, 0.0
        %v715 = vadd.f32 %v687, 0.0
        %v716 = vadd.f32 %v689, 0.0
        %v717 = vadd.f32 %v691, 0.0
        %v718 = vadd.f32 %v693, 0.0
        %v719 = vadd.f32 %v695, 0.0
        %v720 = vadd.f32 %v697, 0.0
        %v721 = vadd.f32 %v699, 0.0
        %v722 = vadd.f32 %v701, 0.0
        %v723 = vadd.f32 %v703, 0.0
        %v724 = vadd.f32 %v705, 0.0
        %v725 = vadd.f32 %v707, 0.0
        %v726 = vadd.f32 %v709, 0.0
        %v727 = vadd.f32 %v711, 0.0
        %v728 = vld [vmem:[#allocation7 + $0x8] sm:$0xff]
        %v729 = vld [vmem:[#allocation7 + $0x18] sm:$0xff]
        %v730 = vld [vmem:[#allocation7 + $0x28] sm:$0xff]
        %v731 = vld [vmem:[#allocation7 + $0x38] sm:$0xff]
        %v732 = vld [vmem:[#allocation7 + $0x48] sm:$0xff]
        %v733 = vld [vmem:[#allocation7 + $0x58] sm:$0xff]
        %v734 = vld [vmem:[#allocation7 + $0x68] sm:$0xff]
        %v735 = vld [vmem:[#allocation7 + $0x78] sm:$0xff]
        %v736 = vld [vmem:[#allocation7 + $0x88] sm:$0xff]
        %v737 = vld [vmem:[#allocation7 + $0x98] sm:$0xff]
        %v738 = vld [vmem:[#allocation7 + $0xa8] sm:$0xff]
        %v739 = vld [vmem:[#allocation7 + $0xb8] sm:$0xff]
        %v740 = vld [vmem:[#allocation7 + $0xc8] sm:$0xff]
        %v741 = vld [vmem:[#allocation7 + $0xd8] sm:$0xff]
        %v742 = vld [vmem:[#allocation7 + $0xe8] sm:$0xff]
        %v743 = vld [vmem:[#allocation7 + $0xf8] sm:$0xff]
        %v744 = vld [vmem:[%s2 + $0x2] sm:$0x3]
        %v746 = vlaneseq
        %v747 = vshrl.u32 %v746, 7
        %v748 = vsub.s32 0, %v747
        %v749 = vrot.slane %v744, %v748
        %v750 = vlaneseq
        %v751 = vshrl.u32 %v750, 7
        %v752 = vsub.s32 1, %v751
        %v753 = vrot.slane %v744, %v752
        %v772 = vunpack.c.l.b16 %v728
        %v773 = vunpack.c.h.b16 %v728
        %v774 = vunpack.c.l.b16 %v729
        %v775 = vunpack.c.h.b16 %v729
        %v776 = vunpack.c.l.b16 %v730
        %v777 = vunpack.c.h.b16 %v730
        %v778 = vunpack.c.l.b16 %v731
        %v779 = vunpack.c.h.b16 %v731
        %v780 = vunpack.c.l.b16 %v732
        %v781 = vunpack.c.h.b16 %v732
        %v782 = vunpack.c.l.b16 %v733
        %v783 = vunpack.c.h.b16 %v733
        %v784 = vunpack.c.l.b16 %v734
        %v785 = vunpack.c.h.b16 %v734
        %v786 = vunpack.c.l.b16 %v735
        %v787 = vunpack.c.h.b16 %v735
        %v788 = vunpack.c.l.b16 %v736
        %v789 = vunpack.c.h.b16 %v736
        %v790 = vunpack.c.l.b16 %v737
        %v791 = vunpack.c.h.b16 %v737
        %v792 = vunpack.c.l.b16 %v738
        %v793 = vunpack.c.h.b16 %v738
        %v794 = vunpack.c.l.b16 %v739
        %v795 = vunpack.c.h.b16 %v739
        %v796 = vunpack.c.l.b16 %v740
        %v797 = vunpack.c.h.b16 %v740
        %v798 = vunpack.c.l.b16 %v741
        %v799 = vunpack.c.h.b16 %v741
        %v800 = vunpack.c.l.b16 %v742
        %v801 = vunpack.c.h.b16 %v742
        %v802 = vunpack.c.l.b16 %v743
        %v803 = vunpack.c.h.b16 %v743
        %v804 = vpack.c.b16 %v774, %v772
        %v805 = vpack.c.b16 %v775, %v773
        %v806 = vpack.c.b16 %v778, %v776
        %v807 = vpack.c.b16 %v779, %v777
        %v808 = vpack.c.b16 %v782, %v780
        %v809 = vpack.c.b16 %v783, %v781
        %v810 = vpack.c.b16 %v786, %v784
        %v811 = vpack.c.b16 %v787, %v785
        %v812 = vpack.c.b16 %v790, %v788
        %v813 = vpack.c.b16 %v791, %v789
        %v814 = vpack.c.b16 %v794, %v792
        %v815 = vpack.c.b16 %v795, %v793
        %v816 = vpack.c.b16 %v798, %v796
        %v817 = vpack.c.b16 %v799, %v797
        %v818 = vpack.c.b16 %v802, %v800
        %v819 = vpack.c.b16 %v803, %v801
        %836 = vmatprep.subr.bf16.mxu0 %v805
        %837 = vmatpush1.bf16.msra.mxu0 %v804
        %838 = vmatprep.subr.bf16.mxu0 %v807
        %839 = vmatpush1.bf16.msra.mxu0 %v806
        %840 = vmatprep.subr.bf16.mxu0 %v809
        %841 = vmatpush1.bf16.msra.mxu0 %v808
        %842 = vmatprep.subr.bf16.mxu0 %v811
        %843 = vmatpush1.bf16.msra.mxu0 %v810
        %844 = vmatprep.subr.bf16.mxu0 %v813
        %845 = vmatpush1.bf16.msra.mxu0 %v812
        %846 = vmatprep.subr.bf16.mxu0 %v815
        %847 = vmatpush1.bf16.msra.mxu0 %v814
        %848 = vmatprep.subr.bf16.mxu0 %v817
        %849 = vmatpush1.bf16.msra.mxu0 %v816
        %850 = vmatprep.subr.bf16.mxu0 %v819
        %851 = vmatpush1.bf16.msra.mxu0 %v818
        %852 = vmatprep.subr.bf16.mxu0 0
        %853 = vmatpush1.bf16.msra.mxu0 0
        %854 = vmatprep.subr.bf16.mxu0 0
        %855 = vmatpush1.bf16.msra.mxu0 0
        %856 = vmatprep.subr.bf16.mxu0 0
        %857 = vmatpush1.bf16.msra.mxu0 0
        %858 = vmatprep.subr.bf16.mxu0 0
        %859 = vmatpush1.bf16.msra.mxu0 0
        %860 = vmatprep.subr.bf16.mxu0 0
        %861 = vmatpush1.bf16.msra.mxu0 0
        %862 = vmatprep.subr.bf16.mxu0 0
        %863 = vmatpush1.bf16.msra.mxu0 0
        %864 = vmatprep.subr.bf16.mxu0 0
        %865 = vmatpush1.bf16.msra.mxu0 0
        %866 = vmatprep.subr.bf16.mxu0 0
        %867 = vmatpush1.bf16.msra.mxu0 0
        %868 = vmatprep.mubr.bf16.mxu0 0
        %869 = vmatmul.mubr.bf16.gmra.mrb[0].mxu0 %v291
        %v870 = vpop.f32.mrb[0].mxu0
        %v871 = vadd.f32 %v749, %v870
        %v872 = vpop.f32.mrb[0].mxu0
        %v873 = vadd.f32 %v753, %v872
        %v874 = vpop.f32.mrb[0].mxu0
        %v875 = vadd.f32 %v749, %v874
        %v876 = vpop.f32.mrb[0].mxu0
        %v877 = vadd.f32 %v753, %v876
        %878 = vmatprep.mubr.bf16.mxu0 0
        %879 = vmatmul.mubr.bf16.gmra.mrb[0].mxu0 %v292
        %v880 = vpop.f32.mrb[0].mxu0
        %v881 = vadd.f32 %v749, %v880
        %v882 = vpop.f32.mrb[0].mxu0
        %v883 = vadd.f32 %v753, %v882
        %v884 = vpop.f32.mrb[0].mxu0
        %v885 = vadd.f32 %v749, %v884
        %v886 = vpop.f32.mrb[0].mxu0
        %v887 = vadd.f32 %v753, %v886
        %888 = vmatprep.mubr.bf16.mxu0 0
        %889 = vmatmul.mubr.bf16.gmra.mrb[0].mxu0 %v293
        %v890 = vpop.f32.mrb[0].mxu0
        %v891 = vadd.f32 %v749, %v890
        %v892 = vpop.f32.mrb[0].mxu0
        %v893 = vadd.f32 %v753, %v892
        %v894 = vpop.f32.mrb[0].mxu0
        %v895 = vadd.f32 %v749, %v894
        %v896 = vpop.f32.mrb[0].mxu0
        %v897 = vadd.f32 %v753, %v896
        %898 = vmatprep.mubr.bf16.mxu0 0
        %899 = vmatmul.mubr.bf16.gmra.mrb[0].mxu0 %v294
        %v900 = vpop.f32.mrb[0].mxu0
        %v901 = vadd.f32 %v749, %v900
        %v902 = vpop.f32.mrb[0].mxu0
        %v903 = vadd.f32 %v753, %v902
        %v904 = vpop.f32.mrb[0].mxu0
        %v905 = vadd.f32 %v749, %v904
        %v906 = vpop.f32.mrb[0].mxu0
        %v907 = vadd.f32 %v753, %v906
        %908 = vmatprep.mubr.bf16.mxu0 0
        %909 = vmatmul.mubr.bf16.gmra.mrb[0].mxu0 %v295
        %v910 = vpop.f32.mrb[0].mxu0
        %v911 = vadd.f32 %v749, %v910
        %v912 = vpop.f32.mrb[0].mxu0
        %v913 = vadd.f32 %v753, %v912
        %v914 = vpop.f32.mrb[0].mxu0
        %v915 = vadd.f32 %v749, %v914
        %v916 = vpop.f32.mrb[0].mxu0
        %v917 = vadd.f32 %v753, %v916
        %918 = vmatprep.mubr.bf16.mxu0 0
        %919 = vmatmul.mubr.bf16.gmra.mrb[0].mxu0 %v296
        %v920 = vpop.f32.mrb[0].mxu0
        %v921 = vadd.f32 %v749, %v920
        %v922 = vpop.f32.mrb[0].mxu0
        %v923 = vadd.f32 %v753, %v922
        %v924 = vpop.f32.mrb[0].mxu0
        %v925 = vadd.f32 %v749, %v924
        %v926 = vpop.f32.mrb[0].mxu0
        %v927 = vadd.f32 %v753, %v926
        %928 = vmatprep.mubr.bf16.mxu0 0
        %929 = vmatmul.mubr.bf16.gmra.mrb[0].mxu0 %v297
        %v930 = vpop.f32.mrb[0].mxu0
        %v931 = vadd.f32 %v749, %v930
        %v932 = vpop.f32.mrb[0].mxu0
        %v933 = vadd.f32 %v753, %v932
        %v934 = vpop.f32.mrb[0].mxu0
        %v935 = vadd.f32 %v749, %v934
        %v936 = vpop.f32.mrb[0].mxu0
        %v937 = vadd.f32 %v753, %v936
        %938 = vmatprep.mubr.bf16.mxu0 0
        %939 = vmatmul.mubr.bf16.gmra.mrb[0].mxu0 %v298
        %v940 = vpop.f32.mrb[0].mxu0
        %v941 = vadd.f32 %v749, %v940
        %v942 = vpop.f32.mrb[0].mxu0
        %v943 = vadd.f32 %v753, %v942
        %v944 = vpop.f32.mrb[0].mxu0
        %v945 = vadd.f32 %v749, %v944
        %v946 = vpop.f32.mrb[0].mxu0
        %v947 = vadd.f32 %v753, %v946
        %948 = vdwg.mxu0
        %v949 = vxor.u32 %v871, 2147483648
        %v950 = vxor.u32 %v875, 2147483648
        %v951 = vxor.u32 %v881, 2147483648
        %v952 = vxor.u32 %v885, 2147483648
        %v953 = vxor.u32 %v891, 2147483648
        %v954 = vxor.u32 %v895, 2147483648
        %v955 = vxor.u32 %v901, 2147483648
        %v956 = vxor.u32 %v905, 2147483648
        %v957 = vxor.u32 %v911, 2147483648
        %v958 = vxor.u32 %v915, 2147483648
        %v959 = vxor.u32 %v921, 2147483648
        %v960 = vxor.u32 %v925, 2147483648
        %v961 = vxor.u32 %v931, 2147483648
        %v962 = vxor.u32 %v935, 2147483648
        %v963 = vxor.u32 %v941, 2147483648
        %v964 = vxor.u32 %v945, 2147483648
        %v965 = vmul.f32 %v949, 1.442695
        %v966 = vpow.pop %v965
        %v967 = vmul.f32 %v950, 1.442695
        %v968 = vpow.pop %v967
        %v969 = vmul.f32 %v951, 1.442695
        %v970 = vpow.pop %v969
        %v971 = vmul.f32 %v952, 1.442695
        %v972 = vpow.pop %v971
        %v973 = vmul.f32 %v953, 1.442695
        %v974 = vpow.pop %v973
        %v975 = vmul.f32 %v954, 1.442695
        %v976 = vpow.pop %v975
        %v977 = vmul.f32 %v955, 1.442695
        %v978 = vpow.pop %v977
        %v979 = vmul.f32 %v956, 1.442695
        %v980 = vpow.pop %v979
        %v981 = vmul.f32 %v957, 1.442695
        %v982 = vpow.pop %v981
        %v983 = vmul.f32 %v958, 1.442695
        %v984 = vpow.pop %v983
        %v985 = vmul.f32 %v959, 1.442695
        %v986 = vpow.pop %v985
        %v987 = vmul.f32 %v960, 1.442695
        %v988 = vpow.pop %v987
        %v989 = vmul.f32 %v961, 1.442695
        %v990 = vpow.pop %v989
        %v991 = vmul.f32 %v962, 1.442695
        %v992 = vpow.pop %v991
        %v993 = vmul.f32 %v963, 1.442695
        %v994 = vpow.pop %v993
        %v995 = vmul.f32 %v964, 1.442695
        %v996 = vpow.pop %v995
        %v997 = vadd.f32 %v966, 1.0
        %v998 = vadd.f32 %v968, 1.0
        %v999 = vadd.f32 %v970, 1.0
        %v1000 = vadd.f32 %v972, 1.0
        %v1001 = vadd.f32 %v974, 1.0
        %v1002 = vadd.f32 %v976, 1.0
        %v1003 = vadd.f32 %v978, 1.0
        %v1004 = vadd.f32 %v980, 1.0
        %v1005 = vadd.f32 %v982, 1.0
        %v1006 = vadd.f32 %v984, 1.0
        %v1007 = vadd.f32 %v986, 1.0
        %v1008 = vadd.f32 %v988, 1.0
        %v1009 = vadd.f32 %v990, 1.0
        %v1010 = vadd.f32 %v992, 1.0
        %v1011 = vadd.f32 %v994, 1.0
        %v1012 = vadd.f32 %v996, 1.0
        %v1013 = vrcp.pop %v997
        %v1014 = vmul.f32 1.0, %v1013
        %v1015 = vrcp.pop %v998
        %v1016 = vmul.f32 1.0, %v1015
        %v1017 = vrcp.pop %v999
        %v1018 = vmul.f32 1.0, %v1017
        %v1019 = vrcp.pop %v1000
        %v1020 = vmul.f32 1.0, %v1019
        %v1021 = vrcp.pop %v1001
        %v1022 = vmul.f32 1.0, %v1021
        %v1023 = vrcp.pop %v1002
        %v1024 = vmul.f32 1.0, %v1023
        %v1025 = vrcp.pop %v1003
        %v1026 = vmul.f32 1.0, %v1025
        %v1027 = vrcp.pop %v1004
        %v1028 = vmul.f32 1.0, %v1027
        %v1029 = vrcp.pop %v1005
        %v1030 = vmul.f32 1.0, %v1029
        %v1031 = vrcp.pop %v1006
        %v1032 = vmul.f32 1.0, %v1031
        %v1033 = vrcp.pop %v1007
        %v1034 = vmul.f32 1.0, %v1033
        %v1035 = vrcp.pop %v1008
        %v1036 = vmul.f32 1.0, %v1035
        %v1037 = vrcp.pop %v1009
        %v1038 = vmul.f32 1.0, %v1037
        %v1039 = vrcp.pop %v1010
        %v1040 = vmul.f32 1.0, %v1039
        %v1041 = vrcp.pop %v1011
        %v1042 = vmul.f32 1.0, %v1041
        %v1043 = vrcp.pop %v1012
        %v1044 = vmul.f32 1.0, %v1043
        %v1045 = vmul.f32 %v871, %v1014
        %v1046 = vmul.f32 %v875, %v1016
        %v1047 = vmul.f32 %v881, %v1018
        %v1048 = vmul.f32 %v885, %v1020
        %v1049 = vmul.f32 %v891, %v1022
        %v1050 = vmul.f32 %v895, %v1024
        %v1051 = vmul.f32 %v901, %v1026
        %v1052 = vmul.f32 %v905, %v1028
        %v1053 = vmul.f32 %v911, %v1030
        %v1054 = vmul.f32 %v915, %v1032
        %v1055 = vmul.f32 %v921, %v1034
        %v1056 = vmul.f32 %v925, %v1036
        %v1057 = vmul.f32 %v931, %v1038
        %v1058 = vmul.f32 %v935, %v1040
        %v1059 = vmul.f32 %v941, %v1042
        %v1060 = vmul.f32 %v945, %v1044
        %v1061 = vmul.f32 %v1045, %v873
        %v1062 = vmul.f32 %v1046, %v877
        %v1063 = vmul.f32 %v1047, %v883
        %v1064 = vmul.f32 %v1048, %v887
        %v1065 = vmul.f32 %v1049, %v893
        %v1066 = vmul.f32 %v1050, %v897
        %v1067 = vmul.f32 %v1051, %v903
        %v1068 = vmul.f32 %v1052, %v907
        %v1069 = vmul.f32 %v1053, %v913
        %v1070 = vmul.f32 %v1054, %v917
        %v1071 = vmul.f32 %v1055, %v923
        %v1072 = vmul.f32 %v1056, %v927
        %v1073 = vmul.f32 %v1057, %v933
        %v1074 = vmul.f32 %v1058, %v937
        %v1075 = vmul.f32 %v1059, %v943
        %v1076 = vmul.f32 %v1060, %v947
        %1077 = vst [vmem:[#allocation2 + $0x8] sm:$0xff] %v1061
        %1078 = vst [vmem:[#allocation2 + $0x18] sm:$0xff] %v1062
        %1079 = vst [vmem:[#allocation2 + $0x28] sm:$0xff] %v1063
        %1080 = vst [vmem:[#allocation2 + $0x38] sm:$0xff] %v1064
        %1081 = vst [vmem:[#allocation2 + $0x48] sm:$0xff] %v1065
        %1082 = vst [vmem:[#allocation2 + $0x58] sm:$0xff] %v1066
        %1083 = vst [vmem:[#allocation2 + $0x68] sm:$0xff] %v1067
        %1084 = vst [vmem:[#allocation2 + $0x78] sm:$0xff] %v1068
        %1085 = vst [vmem:[#allocation2 + $0x88] sm:$0xff] %v1069
        %1086 = vst [vmem:[#allocation2 + $0x98] sm:$0xff] %v1070
        %1087 = vst [vmem:[#allocation2 + $0xa8] sm:$0xff] %v1071
        %1088 = vst [vmem:[#allocation2 + $0xb8] sm:$0xff] %v1072
        %1089 = vst [vmem:[#allocation2 + $0xc8] sm:$0xff] %v1073
        %1090 = vst [vmem:[#allocation2 + $0xd8] sm:$0xff] %v1074
        %1091 = vst [vmem:[#allocation2 + $0xe8] sm:$0xff] %v1075
        %1092 = vst [vmem:[#allocation2 + $0xf8] sm:$0xff] %v1076
        %v1093 = vmul.f32 %v1061, %v1061
        %v1094 = vmul.f32 %v1062, %v1062
        %v1095 = vmul.f32 %v1063, %v1063
        %v1096 = vmul.f32 %v1064, %v1064
        %v1097 = vmul.f32 %v1065, %v1065
        %v1098 = vmul.f32 %v1066, %v1066
        %v1099 = vmul.f32 %v1067, %v1067
        %v1100 = vmul.f32 %v1068, %v1068
        %v1101 = vmul.f32 %v1069, %v1069
        %v1102 = vmul.f32 %v1070, %v1070
        %v1103 = vmul.f32 %v1071, %v1071
        %v1104 = vmul.f32 %v1072, %v1072
        %v1105 = vmul.f32 %v1073, %v1073
        %v1106 = vmul.f32 %v1074, %v1074
        %v1107 = vmul.f32 %v1075, %v1075
        %v1108 = vmul.f32 %v1076, %v1076
        %1109 = vadd.xlane.f32.xlu0 %v1093
        %v1110 = vpop.xlane.xlu0 %1109
        %1111 = vadd.xlane.f32.xlu0 %v1094
        %v1112 = vpop.xlane.xlu0 %1111
        %1113 = vadd.xlane.f32.xlu0 %v1095
        %v1114 = vpop.xlane.xlu0 %1113
        %1115 = vadd.xlane.f32.xlu0 %v1096
        %v1116 = vpop.xlane.xlu0 %1115
        %1117 = vadd.xlane.f32.xlu0 %v1097
        %v1118 = vpop.xlane.xlu0 %1117
        %1119 = vadd.xlane.f32.xlu0 %v1098
        %v1120 = vpop.xlane.xlu0 %1119
        %1121 = vadd.xlane.f32.xlu0 %v1099
        %v1122 = vpop.xlane.xlu0 %1121
        %1123 = vadd.xlane.f32.xlu0 %v1100
        %v1124 = vpop.xlane.xlu0 %1123
        %1125 = vadd.xlane.f32.xlu0 %v1101
        %v1126 = vpop.xlane.xlu0 %1125
        %1127 = vadd.xlane.f32.xlu0 %v1102
        %v1128 = vpop.xlane.xlu0 %1127
        %1129 = vadd.xlane.f32.xlu0 %v1103
        %v1130 = vpop.xlane.xlu0 %1129
        %1131 = vadd.xlane.f32.xlu0 %v1104
        %v1132 = vpop.xlane.xlu0 %1131
        %1133 = vadd.xlane.f32.xlu0 %v1105
        %v1134 = vpop.xlane.xlu0 %1133
        %1135 = vadd.xlane.f32.xlu0 %v1106
        %v1136 = vpop.xlane.xlu0 %1135
        %1137 = vadd.xlane.f32.xlu0 %v1107
        %v1138 = vpop.xlane.xlu0 %1137
        %1139 = vadd.xlane.f32.xlu0 %v1108
        %v1140 = vpop.xlane.xlu0 %1139
        %v1141 = vadd.f32 %v712, %v1110
        %v1142 = vadd.f32 %v713, %v1112
        %v1143 = vadd.f32 %v714, %v1114
        %v1144 = vadd.f32 %v715, %v1116
        %v1145 = vadd.f32 %v716, %v1118
        %v1146 = vadd.f32 %v717, %v1120
        %v1147 = vadd.f32 %v718, %v1122
        %v1148 = vadd.f32 %v719, %v1124
        %v1149 = vadd.f32 %v720, %v1126
        %v1150 = vadd.f32 %v721, %v1128
        %v1151 = vadd.f32 %v722, %v1130
        %v1152 = vadd.f32 %v723, %v1132
        %v1153 = vadd.f32 %v724, %v1134
        %v1154 = vadd.f32 %v725, %v1136
        %v1155 = vadd.f32 %v726, %v1138
        %v1156 = vadd.f32 %v727, %v1140
        %v1157 = vmul.f32 %v1141, 0.00390625
        %v1158 = vmul.f32 %v1142, 0.00390625
        %v1159 = vmul.f32 %v1143, 0.00390625
        %v1160 = vmul.f32 %v1144, 0.00390625
        %v1161 = vmul.f32 %v1145, 0.00390625
        %v1162 = vmul.f32 %v1146, 0.00390625
        %v1163 = vmul.f32 %v1147, 0.00390625
        %v1164 = vmul.f32 %v1148, 0.00390625
        %v1165 = vmul.f32 %v1149, 0.00390625
        %v1166 = vmul.f32 %v1150, 0.00390625
        %v1167 = vmul.f32 %v1151, 0.00390625
        %v1168 = vmul.f32 %v1152, 0.00390625
        %v1169 = vmul.f32 %v1153, 0.00390625
        %v1170 = vmul.f32 %v1154, 0.00390625
        %v1171 = vmul.f32 %v1155, 0.00390625
        %v1172 = vmul.f32 %v1156, 0.00390625
        %v1173 = vadd.f32 %v1157, 1e-06
        %v1174 = vadd.f32 %v1158, 1e-06
        %v1175 = vadd.f32 %v1159, 1e-06
        %v1176 = vadd.f32 %v1160, 1e-06
        %v1177 = vadd.f32 %v1161, 1e-06
        %v1178 = vadd.f32 %v1162, 1e-06
        %v1179 = vadd.f32 %v1163, 1e-06
        %v1180 = vadd.f32 %v1164, 1e-06
        %v1181 = vadd.f32 %v1165, 1e-06
        %v1182 = vadd.f32 %v1166, 1e-06
        %v1183 = vadd.f32 %v1167, 1e-06
        %v1184 = vadd.f32 %v1168, 1e-06
        %v1185 = vadd.f32 %v1169, 1e-06
        %v1186 = vadd.f32 %v1170, 1e-06
        %v1187 = vadd.f32 %v1171, 1e-06
        %v1188 = vadd.f32 %v1172, 1e-06
        %v1189 = vrsqrt.pop %v1173
        %v1190 = vrsqrt.pop %v1174
        %v1191 = vrsqrt.pop %v1175
        %v1192 = vrsqrt.pop %v1176
        %v1193 = vrsqrt.pop %v1177
        %v1194 = vrsqrt.pop %v1178
        %v1195 = vrsqrt.pop %v1179
        %v1196 = vrsqrt.pop %v1180
        %v1197 = vrsqrt.pop %v1181
        %v1198 = vrsqrt.pop %v1182
        %v1199 = vrsqrt.pop %v1183
        %v1200 = vrsqrt.pop %v1184
        %v1201 = vrsqrt.pop %v1185
        %v1202 = vrsqrt.pop %v1186
        %v1203 = vrsqrt.pop %v1187
        %v1204 = vrsqrt.pop %v1188
        %v1205 = vld [vmem:[#allocation2] sm:$0xff]
        %v1206 = vld [vmem:[#allocation2 + $0x10] sm:$0xff]
        %v1207 = vld [vmem:[#allocation2 + $0x20] sm:$0xff]
        %v1208 = vld [vmem:[#allocation2 + $0x30] sm:$0xff]
        %v1209 = vld [vmem:[#allocation2 + $0x40] sm:$0xff]
        %v1210 = vld [vmem:[#allocation2 + $0x50] sm:$0xff]
        %v1211 = vld [vmem:[#allocation2 + $0x60] sm:$0xff]
        %v1212 = vld [vmem:[#allocation2 + $0x70] sm:$0xff]
        %v1213 = vld [vmem:[#allocation2 + $0x80] sm:$0xff]
        %v1214 = vld [vmem:[#allocation2 + $0x90] sm:$0xff]
        %v1215 = vld [vmem:[#allocation2 + $0xa0] sm:$0xff]
        %v1216 = vld [vmem:[#allocation2 + $0xb0] sm:$0xff]
        %v1217 = vld [vmem:[#allocation2 + $0xc0] sm:$0xff]
        %v1218 = vld [vmem:[#allocation2 + $0xd0] sm:$0xff]
        %v1219 = vld [vmem:[#allocation2 + $0xe0] sm:$0xff]
        %v1220 = vld [vmem:[#allocation2 + $0xf0] sm:$0xff]
        %v1221 = vmul.f32 %v1205, %v1189
        %v1222 = vmul.f32 %v1206, %v1190
        %v1223 = vmul.f32 %v1207, %v1191
        %v1224 = vmul.f32 %v1208, %v1192
        %v1225 = vmul.f32 %v1209, %v1193
        %v1226 = vmul.f32 %v1210, %v1194
        %v1227 = vmul.f32 %v1211, %v1195
        %v1228 = vmul.f32 %v1212, %v1196
        %v1229 = vmul.f32 %v1213, %v1197
        %v1230 = vmul.f32 %v1214, %v1198
        %v1231 = vmul.f32 %v1215, %v1199
        %v1232 = vmul.f32 %v1216, %v1200
        %v1233 = vmul.f32 %v1217, %v1201
        %v1234 = vmul.f32 %v1218, %v1202
        %v1235 = vmul.f32 %v1219, %v1203
        %v1236 = vmul.f32 %v1220, %v1204
        %v1237 = vpack.c.bf16 %v1222, %v1221
        %v1238 = vpack.c.bf16 %v1224, %v1223
        %v1239 = vpack.c.bf16 %v1226, %v1225
        %v1240 = vpack.c.bf16 %v1228, %v1227
        %v1241 = vpack.c.bf16 %v1230, %v1229
        %v1242 = vpack.c.bf16 %v1232, %v1231
        %v1243 = vpack.c.bf16 %v1234, %v1233
        %v1244 = vpack.c.bf16 %v1236, %v1235
        %v1245 = vld [vmem:[#allocation9] sm:$0xf]
        %v1246 = vld [vmem:[#allocation9 + $0x4] sm:$0xf]
        %v1247 = vld [vmem:[#allocation9 + $0x8] sm:$0xf]
        %v1248 = vld [vmem:[#allocation9 + $0xc] sm:$0xf]
        %v1249 = vld [vmem:[#allocation9 + $0x10] sm:$0xf]
        %v1250 = vld [vmem:[#allocation9 + $0x14] sm:$0xf]
        %v1251 = vld [vmem:[#allocation9 + $0x18] sm:$0xf]
        %v1252 = vld [vmem:[#allocation9 + $0x1c] sm:$0xf]
        %v1253 = vld [vmem:[#allocation9 + $0x20] sm:$0xf]
        %v1254 = vld [vmem:[#allocation9 + $0x24] sm:$0xf]
        %v1255 = vld [vmem:[#allocation9 + $0x28] sm:$0xf]
        %v1256 = vld [vmem:[#allocation9 + $0x2c] sm:$0xf]
        %v1257 = vld [vmem:[#allocation9 + $0x30] sm:$0xf]
        %v1258 = vld [vmem:[#allocation9 + $0x34] sm:$0xf]
        %v1259 = vld [vmem:[#allocation9 + $0x38] sm:$0xf]
        %v1260 = vld [vmem:[#allocation9 + $0x3c] sm:$0xf]
        %v1277 = vunpack.c.l.b16 %v1245
        %v1278 = vunpack.c.l.b16 %v1246
        %v1279 = vunpack.c.l.b16 %v1247
        %v1280 = vunpack.c.l.b16 %v1248
        %v1281 = vunpack.c.l.b16 %v1249
        %v1282 = vunpack.c.l.b16 %v1250
        %v1283 = vunpack.c.l.b16 %v1251
        %v1284 = vunpack.c.l.b16 %v1252
        %v1285 = vunpack.c.l.b16 %v1253
        %v1286 = vunpack.c.l.b16 %v1254
        %v1287 = vunpack.c.l.b16 %v1255
        %v1288 = vunpack.c.l.b16 %v1256
        %v1289 = vunpack.c.l.b16 %v1257
        %v1290 = vunpack.c.l.b16 %v1258
        %v1291 = vunpack.c.l.b16 %v1259
        %v1292 = vunpack.c.l.b16 %v1260
        %v1293 = vpack.c.b16 %v1278, %v1277
        %v1294 = vpack.c.b16 %v1280, %v1279
        %v1295 = vpack.c.b16 %v1282, %v1281
        %v1296 = vpack.c.b16 %v1284, %v1283
        %v1297 = vpack.c.b16 %v1286, %v1285
        %v1298 = vpack.c.b16 %v1288, %v1287
        %v1299 = vpack.c.b16 %v1290, %v1289
        %v1300 = vpack.c.b16 %v1292, %v1291
        %1309 = vmatprep.subr.bf16.mxu0 0
        %1310 = vmatpush1.bf16.msra.mxu0 %v1293
        %1311 = vmatprep.subr.bf16.mxu0 0
        %1312 = vmatpush1.bf16.msra.mxu0 %v1294
        %1313 = vmatprep.subr.bf16.mxu0 0
        %1314 = vmatpush1.bf16.msra.mxu0 %v1295
        %1315 = vmatprep.subr.bf16.mxu0 0
        %1316 = vmatpush1.bf16.msra.mxu0 %v1296
        %1317 = vmatprep.subr.bf16.mxu0 0
        %1318 = vmatpush1.bf16.msra.mxu0 %v1297
        %1319 = vmatprep.subr.bf16.mxu0 0
        %1320 = vmatpush1.bf16.msra.mxu0 %v1298
        %1321 = vmatprep.subr.bf16.mxu0 0
        %1322 = vmatpush1.bf16.msra.mxu0 %v1299
        %1323 = vmatprep.subr.bf16.mxu0 0
        %1324 = vmatpush1.bf16.msra.mxu0 %v1300
        %1325 = vmatprep.subr.bf16.mxu0 0
        %1326 = vmatpush1.bf16.msra.mxu0 0
        %1327 = vmatprep.subr.bf16.mxu0 0
        %1328 = vmatpush1.bf16.msra.mxu0 0
        %1329 = vmatprep.subr.bf16.mxu0 0
        %1330 = vmatpush1.bf16.msra.mxu0 0
        %1331 = vmatprep.subr.bf16.mxu0 0
        %1332 = vmatpush1.bf16.msra.mxu0 0
        %1333 = vmatprep.subr.bf16.mxu0 0
        %1334 = vmatpush1.bf16.msra.mxu0 0
        %1335 = vmatprep.subr.bf16.mxu0 0
        %1336 = vmatpush1.bf16.msra.mxu0 0
        %1337 = vmatprep.subr.bf16.mxu0 0
        %1338 = vmatpush1.bf16.msra.mxu0 0
        %1339 = vmatprep.subr.bf16.mxu0 0
        %1340 = vmatpush1.bf16.msra.mxu0 0
        %1341 = vmatprep.mubr.bf16.mxu0 0
        %1342 = vmatmul.mubr.bf16.gmra.mrb[0].mxu0 %v1237
        %v1343 = vpop.f32.mrb[0].mxu0
        %v1344 = vadd.f32 0.0, %v1343
        %v1345 = vpop.f32.mrb[0].mxu0
        %v1346 = vpop.f32.mrb[0].mxu0
        %v1347 = vadd.f32 0.0, %v1346
        %v1348 = vpop.f32.mrb[0].mxu0
        %1349 = vmatprep.mubr.bf16.mxu0 0
        %1350 = vmatmul.mubr.bf16.gmra.mrb[0].mxu0 %v1238
        %v1351 = vpop.f32.mrb[0].mxu0
        %v1352 = vadd.f32 0.0, %v1351
        %v1353 = vpop.f32.mrb[0].mxu0
        %v1354 = vpop.f32.mrb[0].mxu0
        %v1355 = vadd.f32 0.0, %v1354
        %v1356 = vpop.f32.mrb[0].mxu0
        %1357 = vmatprep.mubr.bf16.mxu0 0
        %1358 = vmatmul.mubr.bf16.gmra.mrb[0].mxu0 %v1239
        %v1359 = vpop.f32.mrb[0].mxu0
        %v1360 = vadd.f32 0.0, %v1359
        %v1361 = vpop.f32.mrb[0].mxu0
        %v1362 = vpop.f32.mrb[0].mxu0
        %v1363 = vadd.f32 0.0, %v1362
        %v1364 = vpop.f32.mrb[0].mxu0
        %1365 = vmatprep.mubr.bf16.mxu0 0
        %1366 = vmatmul.mubr.bf16.gmra.mrb[0].mxu0 %v1240
        %v1367 = vpop.f32.mrb[0].mxu0
        %v1368 = vadd.f32 0.0, %v1367
        %v1369 = vpop.f32.mrb[0].mxu0
        %v1370 = vpop.f32.mrb[0].mxu0
        %v1371 = vadd.f32 0.0, %v1370
        %v1372 = vpop.f32.mrb[0].mxu0
        %1373 = vmatprep.mubr.bf16.mxu0 0
        %1374 = vmatmul.mubr.bf16.gmra.mrb[0].mxu0 %v1241
        %v1375 = vpop.f32.mrb[0].mxu0
        %v1376 = vadd.f32 0.0, %v1375
        %v1377 = vpop.f32.mrb[0].mxu0
        %v1378 = vpop.f32.mrb[0].mxu0
        %v1379 = vadd.f32 0.0, %v1378
        %v1380 = vpop.f32.mrb[0].mxu0
        %1381 = vmatprep.mubr.bf16.mxu0 0
        %1382 = vmatmul.mubr.bf16.gmra.mrb[0].mxu0 %v1242
        %v1383 = vpop.f32.mrb[0].mxu0
        %v1384 = vadd.f32 0.0, %v1383
        %v1385 = vpop.f32.mrb[0].mxu0
        %v1386 = vpop.f32.mrb[0].mxu0
        %v1387 = vadd.f32 0.0, %v1386
        %v1388 = vpop.f32.mrb[0].mxu0
        %1389 = vmatprep.mubr.bf16.mxu0 0
        %1390 = vmatmul.mubr.bf16.gmra.mrb[0].mxu0 %v1243
        %v1391 = vpop.f32.mrb[0].mxu0
        %v1392 = vadd.f32 0.0, %v1391
        %v1393 = vpop.f32.mrb[0].mxu0
        %v1394 = vpop.f32.mrb[0].mxu0
        %v1395 = vadd.f32 0.0, %v1394
        %v1396 = vpop.f32.mrb[0].mxu0
        %1397 = vmatprep.mubr.bf16.mxu0 0
        %1398 = vmatmul.mubr.bf16.gmra.mrb[0].mxu0 %v1244
        %v1399 = vpop.f32.mrb[0].mxu0
        %v1400 = vadd.f32 0.0, %v1399
        %v1401 = vpop.f32.mrb[0].mxu0
        %v1402 = vpop.f32.mrb[0].mxu0
        %v1403 = vadd.f32 0.0, %v1402
        %v1404 = vpop.f32.mrb[0].mxu0
        %1405 = vdwg.mxu0
        %1406 = vst [vmem:[#allocation3] sm:$0xff] %v1344
        %1407 = vst [vmem:[#allocation3 + $0x8] sm:$0xff] %v1347
        %1408 = vst [vmem:[#allocation3 + $0x10] sm:$0xff] %v1352
        %1409 = vst [vmem:[#allocation3 + $0x18] sm:$0xff] %v1355
        %1410 = vst [vmem:[#allocation3 + $0x20] sm:$0xff] %v1360
        %1411 = vst [vmem:[#allocation3 + $0x28] sm:$0xff] %v1363
        %1412 = vst [vmem:[#allocation3 + $0x30] sm:$0xff] %v1368
        %1413 = vst [vmem:[#allocation3 + $0x38] sm:$0xff] %v1371
        %1414 = vst [vmem:[#allocation3 + $0x40] sm:$0xff] %v1376
        %1415 = vst [vmem:[#allocation3 + $0x48] sm:$0xff] %v1379
        %1416 = vst [vmem:[#allocation3 + $0x50] sm:$0xff] %v1384
        %1417 = vst [vmem:[#allocation3 + $0x58] sm:$0xff] %v1387
        %1418 = vst [vmem:[#allocation3 + $0x60] sm:$0xff] %v1392
        %1419 = vst [vmem:[#allocation3 + $0x68] sm:$0xff] %v1395
        %1420 = vst [vmem:[#allocation3 + $0x70] sm:$0xff] %v1400
        %1421 = vst [vmem:[#allocation3 + $0x78] sm:$0xff] %v1403
        %v1422 = vld [vmem:[#allocation2 + $0x8] sm:$0xff]
        %v1423 = vld [vmem:[#allocation2 + $0x18] sm:$0xff]
        %v1424 = vld [vmem:[#allocation2 + $0x28] sm:$0xff]
        %v1425 = vld [vmem:[#allocation2 + $0x38] sm:$0xff]
        %v1426 = vld [vmem:[#allocation2 + $0x48] sm:$0xff]
        %v1427 = vld [vmem:[#allocation2 + $0x58] sm:$0xff]
        %v1428 = vld [vmem:[#allocation2 + $0x68] sm:$0xff]
        %v1429 = vld [vmem:[#allocation2 + $0x78] sm:$0xff]
        %v1430 = vld [vmem:[#allocation2 + $0x88] sm:$0xff]
        %v1431 = vld [vmem:[#allocation2 + $0x98] sm:$0xff]
        %v1432 = vld [vmem:[#allocation2 + $0xa8] sm:$0xff]
        %v1433 = vld [vmem:[#allocation2 + $0xb8] sm:$0xff]
        %v1434 = vld [vmem:[#allocation2 + $0xc8] sm:$0xff]
        %v1435 = vld [vmem:[#allocation2 + $0xd8] sm:$0xff]
        %v1436 = vld [vmem:[#allocation2 + $0xe8] sm:$0xff]
        %v1437 = vld [vmem:[#allocation2 + $0xf8] sm:$0xff]
        %v1438 = vmul.f32 %v1422, %v1189
        %v1439 = vmul.f32 %v1423, %v1190
        %v1440 = vmul.f32 %v1424, %v1191
        %v1441 = vmul.f32 %v1425, %v1192
        %v1442 = vmul.f32 %v1426, %v1193
        %v1443 = vmul.f32 %v1427, %v1194
        %v1444 = vmul.f32 %v1428, %v1195
        %v1445 = vmul.f32 %v1429, %v1196
        %v1446 = vmul.f32 %v1430, %v1197
        %v1447 = vmul.f32 %v1431, %v1198
        %v1448 = vmul.f32 %v1432, %v1199
        %v1449 = vmul.f32 %v1433, %v1200
        %v1450 = vmul.f32 %v1434, %v1201
        %v1451 = vmul.f32 %v1435, %v1202
        %v1452 = vmul.f32 %v1436, %v1203
        %v1453 = vmul.f32 %v1437, %v1204
        %v1454 = vpack.c.bf16 %v1439, %v1438
        %v1455 = vpack.c.bf16 %v1441, %v1440
        %v1456 = vpack.c.bf16 %v1443, %v1442
        %v1457 = vpack.c.bf16 %v1445, %v1444
        %v1458 = vpack.c.bf16 %v1447, %v1446
        %v1459 = vpack.c.bf16 %v1449, %v1448
        %v1460 = vpack.c.bf16 %v1451, %v1450
        %v1461 = vpack.c.bf16 %v1453, %v1452
        %v1462 = vld [vmem:[#allocation9 + $0x40] sm:$0xf]
        %v1463 = vld [vmem:[#allocation9 + $0x44] sm:$0xf]
        %v1464 = vld [vmem:[#allocation9 + $0x48] sm:$0xf]
        %v1465 = vld [vmem:[#allocation9 + $0x4c] sm:$0xf]
        %v1466 = vld [vmem:[#allocation9 + $0x50] sm:$0xf]
        %v1467 = vld [vmem:[#allocation9 + $0x54] sm:$0xf]
        %v1468 = vld [vmem:[#allocation9 + $0x58] sm:$0xf]
        %v1469 = vld [vmem:[#allocation9 + $0x5c] sm:$0xf]
        %v1470 = vld [vmem:[#allocation9 + $0x60] sm:$0xf]
        %v1471 = vld [vmem:[#allocation9 + $0x64] sm:$0xf]
        %v1472 = vld [vmem:[#allocation9 + $0x68] sm:$0xf]
        %v1473 = vld [vmem:[#allocation9 + $0x6c] sm:$0xf]
        %v1474 = vld [vmem:[#allocation9 + $0x70] sm:$0xf]
        %v1475 = vld [vmem:[#allocation9 + $0x74] sm:$0xf]
        %v1476 = vld [vmem:[#allocation9 + $0x78] sm:$0xf]
        %v1477 = vld [vmem:[#allocation9 + $0x7c] sm:$0xf]
        %v1494 = vunpack.c.l.b16 %v1462
        %v1495 = vunpack.c.l.b16 %v1463
        %v1496 = vunpack.c.l.b16 %v1464
        %v1497 = vunpack.c.l.b16 %v1465
        %v1498 = vunpack.c.l.b16 %v1466
        %v1499 = vunpack.c.l.b16 %v1467
        %v1500 = vunpack.c.l.b16 %v1468
        %v1501 = vunpack.c.l.b16 %v1469
        %v1502 = vunpack.c.l.b16 %v1470
        %v1503 = vunpack.c.l.b16 %v1471
        %v1504 = vunpack.c.l.b16 %v1472
        %v1505 = vunpack.c.l.b16 %v1473
        %v1506 = vunpack.c.l.b16 %v1474
        %v1507 = vunpack.c.l.b16 %v1475
        %v1508 = vunpack.c.l.b16 %v1476
        %v1509 = vunpack.c.l.b16 %v1477
        %v1510 = vpack.c.b16 %v1495, %v1494
        %v1511 = vpack.c.b16 %v1497, %v1496
        %v1512 = vpack.c.b16 %v1499, %v1498
        %v1513 = vpack.c.b16 %v1501, %v1500
        %v1514 = vpack.c.b16 %v1503, %v1502
        %v1515 = vpack.c.b16 %v1505, %v1504
        %v1516 = vpack.c.b16 %v1507, %v1506
        %v1517 = vpack.c.b16 %v1509, %v1508
        %1526 = vmatprep.subr.bf16.mxu0 0
        %1527 = vmatpush1.bf16.msra.mxu0 %v1510
        %1528 = vmatprep.subr.bf16.mxu0 0
        %1529 = vmatpush1.bf16.msra.mxu0 %v1511
        %1530 = vmatprep.subr.bf16.mxu0 0
        %1531 = vmatpush1.bf16.msra.mxu0 %v1512
        %1532 = vmatprep.subr.bf16.mxu0 0
        %1533 = vmatpush1.bf16.msra.mxu0 %v1513
        %1534 = vmatprep.subr.bf16.mxu0 0
        %1535 = vmatpush1.bf16.msra.mxu0 %v1514
        %1536 = vmatprep.subr.bf16.mxu0 0
        %1537 = vmatpush1.bf16.msra.mxu0 %v1515
        %1538 = vmatprep.subr.bf16.mxu0 0
        %1539 = vmatpush1.bf16.msra.mxu0 %v1516
        %1540 = vmatprep.subr.bf16.mxu0 0
        %1541 = vmatpush1.bf16.msra.mxu0 %v1517
        %1542 = vmatprep.subr.bf16.mxu0 0
        %1543 = vmatpush1.bf16.msra.mxu0 0
        %1544 = vmatprep.subr.bf16.mxu0 0
        %1545 = vmatpush1.bf16.msra.mxu0 0
        %1546 = vmatprep.subr.bf16.mxu0 0
        %1547 = vmatpush1.bf16.msra.mxu0 0
        %1548 = vmatprep.subr.bf16.mxu0 0
        %1549 = vmatpush1.bf16.msra.mxu0 0
        %1550 = vmatprep.subr.bf16.mxu0 0
        %1551 = vmatpush1.bf16.msra.mxu0 0
        %1552 = vmatprep.subr.bf16.mxu0 0
        %1553 = vmatpush1.bf16.msra.mxu0 0
        %1554 = vmatprep.subr.bf16.mxu0 0
        %1555 = vmatpush1.bf16.msra.mxu0 0
        %1556 = vmatprep.subr.bf16.mxu0 0
        %1557 = vmatpush1.bf16.msra.mxu0 0
        %1558 = vmatprep.mubr.bf16.mxu0 0
        %1559 = vmatmul.mubr.bf16.gmra.mrb[0].mxu0 %v1454
        %v1560 = vpop.f32.mrb[0].mxu0
        %v1561 = vadd.f32 0.0, %v1560
        %v1562 = vpop.f32.mrb[0].mxu0
        %v1563 = vpop.f32.mrb[0].mxu0
        %v1564 = vadd.f32 0.0, %v1563
        %v1565 = vpop.f32.mrb[0].mxu0
        %1566 = vmatprep.mubr.bf16.mxu0 0
        %1567 = vmatmul.mubr.bf16.gmra.mrb[0].mxu0 %v1455
        %v1568 = vpop.f32.mrb[0].mxu0
        %v1569 = vadd.f32 0.0, %v1568
        %v1570 = vpop.f32.mrb[0].mxu0
        %v1571 = vpop.f32.mrb[0].mxu0
        %v1572 = vadd.f32 0.0, %v1571
        %v1573 = vpop.f32.mrb[0].mxu0
        %1574 = vmatprep.mubr.bf16.mxu0 0
        %1575 = vmatmul.mubr.bf16.gmra.mrb[0].mxu0 %v1456
        %v1576 = vpop.f32.mrb[0].mxu0
        %v1577 = vadd.f32 0.0, %v1576
        %v1578 = vpop.f32.mrb[0].mxu0
        %v1579 = vpop.f32.mrb[0].mxu0
        %v1580 = vadd.f32 0.0, %v1579
        %v1581 = vpop.f32.mrb[0].mxu0
        %1582 = vmatprep.mubr.bf16.mxu0 0
        %1583 = vmatmul.mubr.bf16.gmra.mrb[0].mxu0 %v1457
        %v1584 = vpop.f32.mrb[0].mxu0
        %v1585 = vadd.f32 0.0, %v1584
        %v1586 = vpop.f32.mrb[0].mxu0
        %v1587 = vpop.f32.mrb[0].mxu0
        %v1588 = vadd.f32 0.0, %v1587
        %v1589 = vpop.f32.mrb[0].mxu0
        %1590 = vmatprep.mubr.bf16.mxu0 0
        %1591 = vmatmul.mubr.bf16.gmra.mrb[0].mxu0 %v1458
        %v1592 = vpop.f32.mrb[0].mxu0
        %v1593 = vadd.f32 0.0, %v1592
        %v1594 = vpop.f32.mrb[0].mxu0
        %v1595 = vpop.f32.mrb[0].mxu0
        %v1596 = vadd.f32 0.0, %v1595
        %v1597 = vpop.f32.mrb[0].mxu0
        %1598 = vmatprep.mubr.bf16.mxu0 0
        %1599 = vmatmul.mubr.bf16.gmra.mrb[0].mxu0 %v1459
        %v1600 = vpop.f32.mrb[0].mxu0
        %v1601 = vadd.f32 0.0, %v1600
        %v1602 = vpop.f32.mrb[0].mxu0
        %v1603 = vpop.f32.mrb[0].mxu0
        %v1604 = vadd.f32 0.0, %v1603
        %v1605 = vpop.f32.mrb[0].mxu0
        %1606 = vmatprep.mubr.bf16.mxu0 0
        %1607 = vmatmul.mubr.bf16.gmra.mrb[0].mxu0 %v1460
        %v1608 = vpop.f32.mrb[0].mxu0
        %v1609 = vadd.f32 0.0, %v1608
        %v1610 = vpop.f32.mrb[0].mxu0
        %v1611 = vpop.f32.mrb[0].mxu0
        %v1612 = vadd.f32 0.0, %v1611
        %v1613 = vpop.f32.mrb[0].mxu0
        %1614 = vmatprep.mubr.bf16.mxu0 0
        %1615 = vmatmul.mubr.bf16.gmra.mrb[0].mxu0 %v1461
        %v1616 = vpop.f32.mrb[0].mxu0
        %v1617 = vadd.f32 0.0, %v1616
        %v1618 = vpop.f32.mrb[0].mxu0
        %v1619 = vpop.f32.mrb[0].mxu0
        %v1620 = vadd.f32 0.0, %v1619
        %v1621 = vpop.f32.mrb[0].mxu0
        %1622 = vdwg.mxu0
        %v1623 = vld [vmem:[#allocation3] sm:$0xff]
        %v1624 = vld [vmem:[#allocation3 + $0x8] sm:$0xff]
        %v1625 = vld [vmem:[#allocation3 + $0x10] sm:$0xff]
        %v1626 = vld [vmem:[#allocation3 + $0x18] sm:$0xff]
        %v1627 = vld [vmem:[#allocation3 + $0x20] sm:$0xff]
        %v1628 = vld [vmem:[#allocation3 + $0x28] sm:$0xff]
        %v1629 = vld [vmem:[#allocation3 + $0x30] sm:$0xff]
        %v1630 = vld [vmem:[#allocation3 + $0x38] sm:$0xff]
        %v1631 = vld [vmem:[#allocation3 + $0x40] sm:$0xff]
        %v1632 = vld [vmem:[#allocation3 + $0x48] sm:$0xff]
        %v1633 = vld [vmem:[#allocation3 + $0x50] sm:$0xff]
        %v1634 = vld [vmem:[#allocation3 + $0x58] sm:$0xff]
        %v1635 = vld [vmem:[#allocation3 + $0x60] sm:$0xff]
        %v1636 = vld [vmem:[#allocation3 + $0x68] sm:$0xff]
        %v1637 = vld [vmem:[#allocation3 + $0x70] sm:$0xff]
        %v1638 = vld [vmem:[#allocation3 + $0x78] sm:$0xff]
        %v1639 = vadd.f32 %v1623, %v1561
        %v1640 = vadd.f32 %v1624, %v1564
        %v1641 = vadd.f32 %v1625, %v1569
        %v1642 = vadd.f32 %v1626, %v1572
        %v1643 = vadd.f32 %v1627, %v1577
        %v1644 = vadd.f32 %v1628, %v1580
        %v1645 = vadd.f32 %v1629, %v1585
        %v1646 = vadd.f32 %v1630, %v1588
        %v1647 = vadd.f32 %v1631, %v1593
        %v1648 = vadd.f32 %v1632, %v1596
        %v1649 = vadd.f32 %v1633, %v1601
        %v1650 = vadd.f32 %v1634, %v1604
        %v1651 = vadd.f32 %v1635, %v1609
        %v1652 = vadd.f32 %v1636, %v1612
        %v1653 = vadd.f32 %v1637, %v1617
        %v1654 = vadd.f32 %v1638, %v1620
        %1655 = vst [vmem:[#allocation3] sm:$0xff] %v1639
        %1656 = vst [vmem:[#allocation3 + $0x8] sm:$0xff] %v1640
        %1657 = vst [vmem:[#allocation3 + $0x10] sm:$0xff] %v1641
        %1658 = vst [vmem:[#allocation3 + $0x18] sm:$0xff] %v1642
        %1659 = vst [vmem:[#allocation3 + $0x20] sm:$0xff] %v1643
        %1660 = vst [vmem:[#allocation3 + $0x28] sm:$0xff] %v1644
        %1661 = vst [vmem:[#allocation3 + $0x30] sm:$0xff] %v1645
        %1662 = vst [vmem:[#allocation3 + $0x38] sm:$0xff] %v1646
        %1663 = vst [vmem:[#allocation3 + $0x40] sm:$0xff] %v1647
        %1664 = vst [vmem:[#allocation3 + $0x48] sm:$0xff] %v1648
        %1665 = vst [vmem:[#allocation3 + $0x50] sm:$0xff] %v1649
        %1666 = vst [vmem:[#allocation3 + $0x58] sm:$0xff] %v1650
        %1667 = vst [vmem:[#allocation3 + $0x60] sm:$0xff] %v1651
        %1668 = vst [vmem:[#allocation3 + $0x68] sm:$0xff] %v1652
        %1669 = vst [vmem:[#allocation3 + $0x70] sm:$0xff] %v1653
        %1670 = vst [vmem:[#allocation3 + $0x78] sm:$0xff] %v1654
        %v1671 = vld [vmem:[#allocation3] sm:$0xff]
        %v1672 = vld [vmem:[#allocation3 + $0x8] sm:$0xff]
        %v1673 = vld [vmem:[#allocation3 + $0x10] sm:$0xff]
        %v1674 = vld [vmem:[#allocation3 + $0x18] sm:$0xff]
        %v1675 = vld [vmem:[#allocation3 + $0x20] sm:$0xff]
        %v1676 = vld [vmem:[#allocation3 + $0x28] sm:$0xff]
        %v1677 = vld [vmem:[#allocation3 + $0x30] sm:$0xff]
        %v1678 = vld [vmem:[#allocation3 + $0x38] sm:$0xff]
        %v1679 = vld [vmem:[#allocation3 + $0x40] sm:$0xff]
        %v1680 = vld [vmem:[#allocation3 + $0x48] sm:$0xff]
        %v1681 = vld [vmem:[#allocation3 + $0x50] sm:$0xff]
        %v1682 = vld [vmem:[#allocation3 + $0x58] sm:$0xff]
        %v1683 = vld [vmem:[#allocation3 + $0x60] sm:$0xff]
        %v1684 = vld [vmem:[#allocation3 + $0x68] sm:$0xff]
        %v1685 = vld [vmem:[#allocation3 + $0x70] sm:$0xff]
        %v1686 = vld [vmem:[#allocation3 + $0x78] sm:$0xff]
        %v1687 = vld [vmem:[%s4] sm:$0x1]
        %v1689 = vlaneseq
        %v1690 = vshrl.u32 %v1689, 7
        %v1691 = vsub.s32 0, %v1690
        %v1692 = vrot.slane %v1687, %v1691
        %v1694 = vadd.f32 %v1671, %v1692
        %v1695 = vadd.f32 %v1672, %v1692
        %v1696 = vadd.f32 %v1673, %v1692
        %v1697 = vadd.f32 %v1674, %v1692
        %v1698 = vadd.f32 %v1675, %v1692
        %v1699 = vadd.f32 %v1676, %v1692
        %v1700 = vadd.f32 %v1677, %v1692
        %v1701 = vadd.f32 %v1678, %v1692
        %v1702 = vadd.f32 %v1679, %v1692
        %v1703 = vadd.f32 %v1680, %v1692
        %v1704 = vadd.f32 %v1681, %v1692
        %v1705 = vadd.f32 %v1682, %v1692
        %v1706 = vadd.f32 %v1683, %v1692
        %v1707 = vadd.f32 %v1684, %v1692
        %v1708 = vadd.f32 %v1685, %v1692
        %v1709 = vadd.f32 %v1686, %v1692
        %1710 = vst [vmem:[%s271] sm:$0xff] %v1694
        %1711 = vst [vmem:[%s271 + $0x8] sm:$0xff] %v1695
        %1712 = vst [vmem:[%s271 + $0x10] sm:$0xff] %v1696
        %1713 = vst [vmem:[%s271 + $0x18] sm:$0xff] %v1697
        %1714 = vst [vmem:[%s271 + $0x20] sm:$0xff] %v1698
        %1715 = vst [vmem:[%s271 + $0x28] sm:$0xff] %v1699
        %1716 = vst [vmem:[%s271 + $0x30] sm:$0xff] %v1700
        %1717 = vst [vmem:[%s271 + $0x38] sm:$0xff] %v1701
        %1718 = vst [vmem:[%s271 + $0x40] sm:$0xff] %v1702
        %1719 = vst [vmem:[%s271 + $0x48] sm:$0xff] %v1703
        %1720 = vst [vmem:[%s271 + $0x50] sm:$0xff] %v1704
        %1721 = vst [vmem:[%s271 + $0x58] sm:$0xff] %v1705
        %1722 = vst [vmem:[%s271 + $0x60] sm:$0xff] %v1706
        %1723 = vst [vmem:[%s271 + $0x68] sm:$0xff] %v1707
        %1724 = vst [vmem:[%s271 + $0x70] sm:$0xff] %v1708
        %1725 = vst [vmem:[%s271 + $0x78] sm:$0xff] %v1709
        %s1726 = sand.u32 %s141, 1
        %s1727 = scalar_lea.sflag [#allocation6], %s1726
        %s1728 = sand.u32 %s141, 1
        %s1729 = smul.addr %s1728, 128
        %s1730 = scalar_lea.vmem [#allocation10], %s1729
        // Predicated region
        $region53: #{tpu_custom_call.1} parent=39 // pred_check
          %p1731 = pneg %p151
        $region54: #{tpu_custom_call.1} parent=39 // pred_check_branch
          %1733 = sbr.rel (%p1731) target = $region56
        $region55: #{tpu_custom_call.1} parent=39 // pred_region
          %s1734 = smul.u32 16, %s23
          %s1736 = ssub.s32 2048, 2048
          %1737 = vsyncadd %s1727, %s1736
          %s1738 = smul.addr %s1734, 128
          %s1739 = scalar_lea.hbm %s5, %s1738
          %s1740 = sshll.u32 %s1730, 4
          %s1741 = int_to_ptr.vmem [resolvable:$true] %s1740
          %1746 = dma.vmem_to_hbm [thread:$0]  %s1741, 2048, %s1739, %s1727, 128, 128, 8
        $region56: #{tpu_custom_call.1} parent=39 // pred_fallthru
          _
      $region40: #{tpu_custom_call.1} parent=5 // pred_fallthru
        _
      %p1747 = scmp.le.s32.totalorder 2, %s18
      // Predicated region
      $region57: #{tpu_custom_call.1} parent=5 // pred_check
        %p1748 = pneg %p1747
      $region58: #{tpu_custom_call.1} parent=5 // pred_check_branch
        %1750 = sbr.rel (%p1748) target = $region60
      $region59: #{tpu_custom_call.1} parent=5 // pred_region
        %s1751 = ssub.s32 %s18, 2
        // Predicated region
        $region61: #{tpu_custom_call.1} parent=59 // pred_check
          %p1752 = pneg %p157
        $region62: #{tpu_custom_call.1} parent=59 // pred_check_branch
          %1754 = sbr.rel (%p1752) target = $region64
        $region63: #{tpu_custom_call.1} parent=59 // pred_region
          %s1755 = sand.u32 %s142, 1
          %s1756 = scalar_lea.sflag [#allocation6], %s1755
          %s1757 = sand.u32 %s142, 1
          %s1758 = smul.addr %s1757, 128
          %s1759 = scalar_lea.vmem [#allocation10], %s1758
          %1760 = dma.done %s1756, 2048
        $region64: #{tpu_custom_call.1} parent=59 // pred_fallthru
          _
      $region60: #{tpu_custom_call.1} parent=5 // pred_fallthru
        _
    $region6: #{tpu_custom_call.1} parent=1 // loop_footer
      %s22 = sadd.s32 1, %s18
    $region7: #{tpu_custom_call.1} parent=1 // loop_footer_branch
      %17 = sbr.rel target = $region3
    $region8: #{tpu_custom_call.1} parent=1 // loop_exit
      _
    %1761 = vsyncpa [#allocation5], 1
    %s1762 = scalar_lea.sflag [#allocation5], 1
    %1763 = vsyncpa %s1762, 1
    %1764 = vsyncpa [#allocation8], 1
    %1765 = vsyncpa [#allocation6], 1
    %s1766 = scalar_lea.sflag [#allocation6], 1
    %1767 = vsyncpa %s1766, 1

</llo_original>
